<compile_context>
chip_gen: v6e
topology: v6e:2x2x1
jax: 0.10.0
libtpu: 0.0.40
codegen_flags: <defaults>
</compile_context>

<pallas_src>
import jax
import jax.numpy as jnp
import numpy as np
from jax.experimental import pallas as pl
from jax.experimental import pallas as _pl  # noqa: F401 (clarity)
from jax.experimental.pallas import tpu as pltpu


# ------------------------------------------------------------------ fused kernel
def _make_fused_kernel(T, B, H, num_layers):
    """Build the fused forward kernel for static (T, B, H, num_layers)."""

    def lstm_cell(pre, c):
        # pre: (B, 4H) pre-activation gates, PyTorch gate order i, f, g, o.
        # Activations over the full 128-lane vreg: 2 EUP pushes for the gates
        # (+1 below for tanh(c_new)) instead of 4 separate 32-lane pushes.
        sig = jax.nn.sigmoid(pre)          # (B, 4H)
        th = jnp.tanh(pre)                 # (B, 4H)
        i_g = sig[:, 0 * H:1 * H]
        f_g = sig[:, 1 * H:2 * H]
        g_g = th[:, 2 * H:3 * H]
        o_g = sig[:, 3 * H:4 * H]
        c_new = f_g * c + i_g * g_g
        h_new = o_g * jnp.tanh(c_new)
        return h_new, c_new

    def kernel(*refs):
        # refs = [x_flat, wih0, whh0, b0, (w_fused, b) * (L-1), fc_w, fc_b, out]
        x_ref = refs[0]
        wih0_ref, whh0_ref, b0_ref = refs[1], refs[2], refs[3]
        upper_refs = refs[4:4 + 2 * (num_layers - 1)]
        fc_w_ref = refs[4 + 2 * (num_layers - 1)]
        fc_b_ref = refs[5 + 2 * (num_layers - 1)]
        out_ref = refs[6 + 2 * (num_layers - 1)]

        wih0 = wih0_ref[...]                               # (D_in, 4H)
        whh0 = whh0_ref[...]                               # (H,    4H)
        b0 = b0_ref[...]                                   # (1,    4H)
        wf = [upper_refs[2 * i][...] for i in range(num_layers - 1)]      # (2H, 4H)
        bf = [upper_refs[2 * i + 1][...] for i in range(num_layers - 1)]  # (1,  4H)

        # ---- hoisted, non-recurrent layer-0 input projection ----------------
        # One (T*B, D_in) @ (D_in, 4H) matmul feeds every timestep.
        xp = jnp.dot(x_ref[...], wih0, preferred_element_type=jnp.float32) + b0

        h = [jnp.zeros((B, H), jnp.float32) for _ in range(num_layers)]
        c = [jnp.zeros((B, H), jnp.float32) for _ in range(num_layers)]

        # ---- single interleaved time loop (T small & static -> unrolled) ----
        # TODO(synk): switch to lax.fori_loop(..., unroll=True) if T grows >~16.
        for t in range(T):
            # layer 0 (per-step block is one tile-aligned (8,128) vreg)
            pre0 = (xp[t * B:(t + 1) * B, :]
                    + jnp.dot(h[0], whh0, preferred_element_type=jnp.float32))
            h[0], c[0] = lstm_cell(pre0, c[0])
            inp = h[0]
            # layers 1..L-1: one fused (B,2H)@(2H,4H) matmul per step
            for l in range(1, num_layers):
                hin = jnp.concatenate([inp, h[l]], axis=-1)          # (B, 2H)
                pre = (jnp.dot(hin, wf[l - 1],
                               preferred_element_type=jnp.float32) + bf[l - 1])
                h[l], c[l] = lstm_cell(pre, c[l])
                inp = h[l]

        # ---- FC head on the last timestep of the last layer ------------------
        out_ref[...] = (jnp.dot(h[num_layers - 1], fc_w_ref[...],
                                preferred_element_type=jnp.float32)
                        + fc_b_ref[...]).astype(out_ref.dtype)

    return kernel


# ------------------------------------------------------------------ forward
def semg_lstm_forward(params, x_btd):
    """x_btd: (B, T, input_size), batch_first like PyTorch. Returns (B, num_classes)."""
    B, T, D_in = x_btd.shape
    wih0, whh0, b0 = params["l0"]
    H = whh0.shape[0]
    fc_w, fc_b = params["fc"]
    C = fc_w.shape[-1]
    num_layers = 1 + len(params["upper"])

    # Pad batch to the f32 sublane tile (8): every per-timestep block of xp is
    # then a full, tile-aligned (8,128) vreg; padded rows are sliced off below.
    B_pad = ((B + 7) // 8) * 8
    if B_pad != B:
        x_btd = jnp.pad(x_btd, ((0, B_pad - B), (0, 0), (0, 0)))

    # time-major, flattened to (T*B_pad, D_in) so the layer-0 input projection
    # is one batched matmul inside the kernel.
    x_flat = (jnp.transpose(x_btd, (1, 0, 2))
              .reshape(T * B_pad, D_in).astype(jnp.float32))

    args = [x_flat, wih0, whh0, b0]
    for (w_fused, b) in params["upper"]:
        args += [w_fused, b]
    args += [fc_w, fc_b]

    kernel = _make_fused_kernel(T, B_pad, H, num_layers)
    out = pl.pallas_call(
        kernel,
        out_shape=jax.ShapeDtypeStruct((B_pad, C), jnp.float32),
        in_specs=[pl.BlockSpec(memory_space=pltpu.MemorySpace.VMEM)
                  for _ in args],
        out_specs=pl.BlockSpec(memory_space=pltpu.MemorySpace.VMEM),
        compiler_params=pltpu.CompilerParams(),
    )(*args)
    return out if B_pad == B else out[:B]


# ------------------------------------------------------------------ params
def init_params(key, input_size, hidden_size, num_layers, num_classes):
    """PyTorch-style init (U(-k, k), k = 1/sqrt(H)); stores raw + kernel-packed weights."""
    k = 1.0 / np.sqrt(hidden_size)
    raw, upper, l0 = [], [], None
    for layer in range(num_layers):
        d_in = input_size if layer == 0 else hidden_size
        key, k1, k2, k3, k4 = jax.random.split(key, 5)
        w_ih = jax.random.uniform(k1, (4 * hidden_size, d_in), jnp.float32, -k, k)
        w_hh = jax.random.uniform(k2, (4 * hidden_size, hidden_size), jnp.float32, -k, k)
        b_ih = jax.random.uniform(k3, (4 * hidden_size,), jnp.float32, -k, k)
        b_hh = jax.random.uniform(k4, (4 * hidden_size,), jnp.float32, -k, k)
        raw.append((w_ih, w_hh, b_ih, b_hh))
        b = (b_ih + b_hh).reshape(1, 4 * hidden_size)
        if layer == 0:
            # lane-dense packed layout: (D_in, 4H), (H, 4H), (1, 4H)
            l0 = (w_ih.T, w_hh.T, b)
        else:
            # fused input+recurrent weight: rows [0,H) multiply the hidden
            # state from the layer below, rows [H,2H) multiply this layer's
            # own recurrent hidden state.
            w_fused = jnp.concatenate([w_ih.T, w_hh.T], axis=0)   # (2H, 4H)
            upper.append((w_fused, b))
    key, k5, k6 = jax.random.split(key, 3)
    fc_w = jax.random.uniform(k5, (num_classes, hidden_size), jnp.float32, -k, k)
    fc_b = jax.random.uniform(k6, (num_classes,), jnp.float32, -k, k)
    return {"l0": l0, "upper": upper,
            "fc": (fc_w.T, fc_b.reshape(1, num_classes)),
            "lstm_raw": raw, "fc_raw": (fc_w, fc_b)}


# ------------------------------------------------------------------ pure-JAX reference
def reference_forward(params, x_btd):
    """Mirrors PyTorch nn.LSTM(batch_first=True) + Linear on out[:, -1, :]."""
    x = jnp.transpose(x_btd, (1, 0, 2)).astype(jnp.float32)   # (T, B, D)
    H = params["lstm_raw"][0][1].shape[-1]
    for (w_ih, w_hh, b_ih, b_hh) in params["lstm_raw"]:
        B = x.shape[1]

        def step(carry, xt):
            h, c = carry
            g = xt @ w_ih.T + b_ih + h @ w_hh.T + b_hh
            i_g = jax.nn.sigmoid(g[:, 0 * H:1 * H])
            f_g = jax.nn.sigmoid(g[:, 1 * H:2 * H])
            g_g = jnp.tanh(g[:, 2 * H:3 * H])
            o_g = jax.nn.sigmoid(g[:, 3 * H:4 * H])
            c = f_g * c + i_g * g_g
            h = o_g * jnp.tanh(c)
            return (h, c), h

        init = (jnp.zeros((B, H), jnp.float32), jnp.zeros((B, H), jnp.float32))
        _, x = jax.lax.scan(step, init, x)
    fc_w, fc_b = params["fc_raw"]
    return x[-1] @ fc_w.T + fc_b


# ------------------------------------------------------------------ main
if __name__ == "__main__":
    B, T = 4, 8
    input_size, hidden_size, num_layers, num_classes = 8, 32, 2, 6

    key = jax.random.PRNGKey(0)
    key, pkey, xkey = jax.random.split(key, 3)
    params = init_params(pkey, input_size, hidden_size, num_layers, num_classes)
    x = jax.random.normal(xkey, (B, T, input_size), jnp.float32)

    fwd = jax.jit(semg_lstm_forward)
    out = jax.block_until_ready(fwd(params, x))

    ref = jax.block_until_ready(reference_forward(params, x))
    np.testing.assert_allclose(np.asarray(out), np.asarray(ref), atol=1e-4, rtol=1e-4)

    assert out.shape == (B, num_classes)
    print("KERNEL_OK")
</pallas_src>

<mosaic_0001>
module attributes {stable_mosaic.version = 11 : i64} {
  func.func @kernel(%arg0: memref<64x8xf32, #tpu.memory_space<vmem>>, %arg1: memref<8x128xf32, #tpu.memory_space<vmem>>, %arg2: memref<32x128xf32, #tpu.memory_space<vmem>>, %arg3: memref<1x128xf32, #tpu.memory_space<vmem>>, %arg4: memref<64x128xf32, #tpu.memory_space<vmem>>, %arg5: memref<1x128xf32, #tpu.memory_space<vmem>>, %arg6: memref<32x6xf32, #tpu.memory_space<vmem>>, %arg7: memref<1x6xf32, #tpu.memory_space<vmem>>, %arg8: memref<8x6xf32, #tpu.memory_space<vmem>>) attributes {dimension_semantics = [], scalar_prefetch = 0 : i64, scratch_operands = 0 : i64, tpu.core_type = #tpu.core_type<tc>} {
    %c0 = arith.constant 0 : index
    %c0_0 = arith.constant 0 : index
    %0 = vector.load %arg1[%c0, %c0_0] : memref<8x128xf32, #tpu.memory_space<vmem>>, vector<8x128xf32>
    %c0_1 = arith.constant 0 : index
    %c0_2 = arith.constant 0 : index
    %1 = vector.load %arg2[%c0_1, %c0_2] : memref<32x128xf32, #tpu.memory_space<vmem>>, vector<32x128xf32>
    %c0_3 = arith.constant 0 : index
    %c0_4 = arith.constant 0 : index
    %2 = vector.load %arg3[%c0_3, %c0_4] : memref<1x128xf32, #tpu.memory_space<vmem>>, vector<1x128xf32>
    %c0_5 = arith.constant 0 : index
    %c0_6 = arith.constant 0 : index
    %3 = vector.load %arg4[%c0_5, %c0_6] : memref<64x128xf32, #tpu.memory_space<vmem>>, vector<64x128xf32>
    %c0_7 = arith.constant 0 : index
    %c0_8 = arith.constant 0 : index
    %4 = vector.load %arg5[%c0_7, %c0_8] : memref<1x128xf32, #tpu.memory_space<vmem>>, vector<1x128xf32>
    %c0_9 = arith.constant 0 : index
    %c0_10 = arith.constant 0 : index
    %5 = vector.load %arg0[%c0_9, %c0_10] : memref<64x8xf32, #tpu.memory_space<vmem>>, vector<64x8xf32>
    %cst = arith.constant dense<0.000000e+00> : vector<64x128xf32>
    %6 = tpu.matmul %5, %0, %cst {dimension_numbers = #tpu.dot_dimension_numbers<[1], [0], [0], [1], [0, 0, 1, 1], [], []>} : vector<64x8xf32>, vector<8x128xf32>, vector<64x128xf32> -> vector<64x128xf32>
    %7 = vector.broadcast %2 : vector<1x128xf32> to vector<64x128xf32>
    %8 = arith.addf %6, %7 : vector<64x128xf32>
    %cst_11 = arith.constant 0.000000e+00 : f32
    %9 = vector.broadcast %cst_11 : f32 to vector<8x32xf32>
    %cst_12 = arith.constant 0.000000e+00 : f32
    %10 = vector.broadcast %cst_12 : f32 to vector<8x32xf32>
    %cst_13 = arith.constant 0.000000e+00 : f32
    %11 = vector.broadcast %cst_13 : f32 to vector<8x32xf32>
    %cst_14 = arith.constant 0.000000e+00 : f32
    %12 = vector.broadcast %cst_14 : f32 to vector<8x32xf32>
    %13 = vector.extract_strided_slice %8 {offsets = [0, 0], sizes = [8, 128], strides = [1, 1]} : vector<64x128xf32> to vector<8x128xf32>
    %cst_15 = arith.constant dense<0.000000e+00> : vector<8x128xf32>
    %14 = tpu.matmul %9, %1, %cst_15 {dimension_numbers = #tpu.dot_dimension_numbers<[1], [0], [0], [1], [0, 0, 1, 1], [], []>} : vector<8x32xf32>, vector<32x128xf32>, vector<8x128xf32> -> vector<8x128xf32>
    %15 = arith.addf %13, %14 : vector<8x128xf32>
    %16 = arith.negf %15 : vector<8x128xf32>
    %17 = math.exp %16 : vector<8x128xf32>
    %cst_16 = arith.constant 1.000000e+00 : f32
    %18 = vector.broadcast %cst_16 : f32 to vector<8x128xf32>
    %19 = arith.addf %18, %17 : vector<8x128xf32>
    %20 = arith.divf %18, %19 : vector<8x128xf32>
    %21 = math.tanh %15 : vector<8x128xf32>
    %22 = vector.extract_strided_slice %20 {offsets = [0, 0], sizes = [8, 32], strides = [1, 1]} : vector<8x128xf32> to vector<8x32xf32>
    %23 = vector.extract_strided_slice %20 {offsets = [0, 32], sizes = [8, 32], strides = [1, 1]} : vector<8x128xf32> to vector<8x32xf32>
    %24 = vector.extract_strided_slice %21 {offsets = [0, 64], sizes = [8, 32], strides = [1, 1]} : vector<8x128xf32> to vector<8x32xf32>
    %25 = vector.extract_strided_slice %20 {offsets = [0, 96], sizes = [8, 32], strides = [1, 1]} : vector<8x128xf32> to vector<8x32xf32>
    %26 = arith.mulf %23, %11 : vector<8x32xf32>
    %27 = arith.mulf %22, %24 : vector<8x32xf32>
    %28 = arith.addf %26, %27 : vector<8x32xf32>
    %29 = math.tanh %28 : vector<8x32xf32>
    %30 = arith.mulf %25, %29 : vector<8x32xf32>
    %31 = tpu.concatenate %30, %10 in 1 : vector<8x32xf32>, vector<8x32xf32> -> vector<8x64xf32>
    %cst_17 = arith.constant dense<0.000000e+00> : vector<8x128xf32>
    %32 = tpu.matmul %31, %3, %cst_17 {dimension_numbers = #tpu.dot_dimension_numbers<[1], [0], [0], [1], [0, 0, 1, 1], [], []>} : vector<8x64xf32>, vector<64x128xf32>, vector<8x128xf32> -> vector<8x128xf32>
    %33 = vector.broadcast %4 : vector<1x128xf32> to vector<8x128xf32>
    %34 = arith.addf %32, %33 : vector<8x128xf32>
    %35 = arith.negf %34 : vector<8x128xf32>
    %36 = math.exp %35 : vector<8x128xf32>
    %cst_18 = arith.constant 1.000000e+00 : f32
    %37 = vector.broadcast %cst_18 : f32 to vector<8x128xf32>
    %38 = arith.addf %37, %36 : vector<8x128xf32>
    %39 = arith.divf %37, %38 : vector<8x128xf32>
    %40 = math.tanh %34 : vector<8x128xf32>
    %41 = vector.extract_strided_slice %39 {offsets = [0, 0], sizes = [8, 32], strides = [1, 1]} : vector<8x128xf32> to vector<8x32xf32>
    %42 = vector.extract_strided_slice %39 {offsets = [0, 32], sizes = [8, 32], strides = [1, 1]} : vector<8x128xf32> to vector<8x32xf32>
    %43 = vector.extract_strided_slice %40 {offsets = [0, 64], sizes = [8, 32], strides = [1, 1]} : vector<8x128xf32> to vector<8x32xf32>
    %44 = vector.extract_strided_slice %39 {offsets = [0, 96], sizes = [8, 32], strides = [1, 1]} : vector<8x128xf32> to vector<8x32xf32>
    %45 = arith.mulf %42, %12 : vector<8x32xf32>
    %46 = arith.mulf %41, %43 : vector<8x32xf32>
    %47 = arith.addf %45, %46 : vector<8x32xf32>
    %48 = math.tanh %47 : vector<8x32xf32>
    %49 = arith.mulf %44, %48 : vector<8x32xf32>
    %50 = vector.extract_strided_slice %8 {offsets = [8, 0], sizes = [8, 128], strides = [1, 1]} : vector<64x128xf32> to vector<8x128xf32>
    %cst_19 = arith.constant dense<0.000000e+00> : vector<8x128xf32>
    %51 = tpu.matmul %30, %1, %cst_19 {dimension_numbers = #tpu.dot_dimension_numbers<[1], [0], [0], [1], [0, 0, 1, 1], [], []>} : vector<8x32xf32>, vector<32x128xf32>, vector<8x128xf32> -> vector<8x128xf32>
    %52 = arith.addf %50, %51 : vector<8x128xf32>
    %53 = arith.negf %52 : vector<8x128xf32>
    %54 = math.exp %53 : vector<8x128xf32>
    %cst_20 = arith.constant 1.000000e+00 : f32
    %55 = vector.broadcast %cst_20 : f32 to vector<8x128xf32>
    %56 = arith.addf %55, %54 : vector<8x128xf32>
    %57 = arith.divf %55, %56 : vector<8x128xf32>
    %58 = math.tanh %52 : vector<8x128xf32>
    %59 = vector.extract_strided_slice %57 {offsets = [0, 0], sizes = [8, 32], strides = [1, 1]} : vector<8x128xf32> to vector<8x32xf32>
    %60 = vector.extract_strided_slice %57 {offsets = [0, 32], sizes = [8, 32], strides = [1, 1]} : vector<8x128xf32> to vector<8x32xf32>
    %61 = vector.extract_strided_slice %58 {offsets = [0, 64], sizes = [8, 32], strides = [1, 1]} : vector<8x128xf32> to vector<8x32xf32>
    %62 = vector.extract_strided_slice %57 {offsets = [0, 96], sizes = [8, 32], strides = [1, 1]} : vector<8x128xf32> to vector<8x32xf32>
    %63 = arith.mulf %60, %28 : vector<8x32xf32>
    %64 = arith.mulf %59, %61 : vector<8x32xf32>
    %65 = arith.addf %63, %64 : vector<8x32xf32>
    %66 = math.tanh %65 : vector<8x32xf32>
    %67 = arith.mulf %62, %66 : vector<8x32xf32>
    %68 = tpu.concatenate %67, %49 in 1 : vector<8x32xf32>, vector<8x32xf32> -> vector<8x64xf32>
    %cst_21 = arith.constant dense<0.000000e+00> : vector<8x128xf32>
    %69 = tpu.matmul %68, %3, %cst_21 {dimension_numbers = #tpu.dot_dimension_numbers<[1], [0], [0], [1], [0, 0, 1, 1], [], []>} : vector<8x64xf32>, vector<64x128xf32>, vector<8x128xf32> -> vector<8x128xf32>
    %70 = vector.broadcast %4 : vector<1x128xf32> to vector<8x128xf32>
    %71 = arith.addf %69, %70 : vector<8x128xf32>
    %72 = arith.negf %71 : vector<8x128xf32>
    %73 = math.exp %72 : vector<8x128xf32>
    %cst_22 = arith.constant 1.000000e+00 : f32
    %74 = vector.broadcast %cst_22 : f32 to vector<8x128xf32>
    %75 = arith.addf %74, %73 : vector<8x128xf32>
    %76 = arith.divf %74, %75 : vector<8x128xf32>
    %77 = math.tanh %71 : vector<8x128xf32>
    %78 = vector.extract_strided_slice %76 {offsets = [0, 0], sizes = [8, 32], strides = [1, 1]} : vector<8x128xf32> to vector<8x32xf32>
    %79 = vector.extract_strided_slice %76 {offsets = [0, 32], sizes = [8, 32], strides = [1, 1]} : vector<8x128xf32> to vector<8x32xf32>
    %80 = vector.extract_strided_slice %77 {offsets = [0, 64], sizes = [8, 32], strides = [1, 1]} : vector<8x128xf32> to vector<8x32xf32>
    %81 = vector.extract_strided_slice %76 {offsets = [0, 96], sizes = [8, 32], strides = [1, 1]} : vector<8x128xf32> to vector<8x32xf32>
    %82 = arith.mulf %79, %47 : vector<8x32xf32>
    %83 = arith.mulf %78, %80 : vector<8x32xf32>
    %84 = arith.addf %82, %83 : vector<8x32xf32>
    %85 = math.tanh %84 : vector<8x32xf32>
    %86 = arith.mulf %81, %85 : vector<8x32xf32>
    %87 = vector.extract_strided_slice %8 {offsets = [16, 0], sizes = [8, 128], strides = [1, 1]} : vector<64x128xf32> to vector<8x128xf32>
    %cst_23 = arith.constant dense<0.000000e+00> : vector<8x128xf32>
    %88 = tpu.matmul %67, %1, %cst_23 {dimension_numbers = #tpu.dot_dimension_numbers<[1], [0], [0], [1], [0, 0, 1, 1], [], []>} : vector<8x32xf32>, vector<32x128xf32>, vector<8x128xf32> -> vector<8x128xf32>
    %89 = arith.addf %87, %88 : vector<8x128xf32>
    %90 = arith.negf %89 : vector<8x128xf32>
    %91 = math.exp %90 : vector<8x128xf32>
    %cst_24 = arith.constant 1.000000e+00 : f32
    %92 = vector.broadcast %cst_24 : f32 to vector<8x128xf32>
    %93 = arith.addf %92, %91 : vector<8x128xf32>
    %94 = arith.divf %92, %93 : vector<8x128xf32>
    %95 = math.tanh %89 : vector<8x128xf32>
    %96 = vector.extract_strided_slice %94 {offsets = [0, 0], sizes = [8, 32], strides = [1, 1]} : vector<8x128xf32> to vector<8x32xf32>
    %97 = vector.extract_strided_slice %94 {offsets = [0, 32], sizes = [8, 32], strides = [1, 1]} : vector<8x128xf32> to vector<8x32xf32>
    %98 = vector.extract_strided_slice %95 {offsets = [0, 64], sizes = [8, 32], strides = [1, 1]} : vector<8x128xf32> to vector<8x32xf32>
    %99 = vector.extract_strided_slice %94 {offsets = [0, 96], sizes = [8, 32], strides = [1, 1]} : vector<8x128xf32> to vector<8x32xf32>
    %100 = arith.mulf %97, %65 : vector<8x32xf32>
    %101 = arith.mulf %96, %98 : vector<8x32xf32>
    %102 = arith.addf %100, %101 : vector<8x32xf32>
    %103 = math.tanh %102 : vector<8x32xf32>
    %104 = arith.mulf %99, %103 : vector<8x32xf32>
    %105 = tpu.concatenate %104, %86 in 1 : vector<8x32xf32>, vector<8x32xf32> -> vector<8x64xf32>
    %cst_25 = arith.constant dense<0.000000e+00> : vector<8x128xf32>
    %106 = tpu.matmul %105, %3, %cst_25 {dimension_numbers = #tpu.dot_dimension_numbers<[1], [0], [0], [1], [0, 0, 1, 1], [], []>} : vector<8x64xf32>, vector<64x128xf32>, vector<8x128xf32> -> vector<8x128xf32>
    %107 = vector.broadcast %4 : vector<1x128xf32> to vector<8x128xf32>
    %108 = arith.addf %106, %107 : vector<8x128xf32>
    %109 = arith.negf %108 : vector<8x128xf32>
    %110 = math.exp %109 : vector<8x128xf32>
    %cst_26 = arith.constant 1.000000e+00 : f32
    %111 = vector.broadcast %cst_26 : f32 to vector<8x128xf32>
    %112 = arith.addf %111, %110 : vector<8x128xf32>
    %113 = arith.divf %111, %112 : vector<8x128xf32>
    %114 = math.tanh %108 : vector<8x128xf32>
    %115 = vector.extract_strided_slice %113 {offsets = [0, 0], sizes = [8, 32], strides = [1, 1]} : vector<8x128xf32> to vector<8x32xf32>
    %116 = vector.extract_strided_slice %113 {offsets = [0, 32], sizes = [8, 32], strides = [1, 1]} : vector<8x128xf32> to vector<8x32xf32>
    %117 = vector.extract_strided_slice %114 {offsets = [0, 64], sizes = [8, 32], strides = [1, 1]} : vector<8x128xf32> to vector<8x32xf32>
    %118 = vector.extract_strided_slice %113 {offsets = [0, 96], sizes = [8, 32], strides = [1, 1]} : vector<8x128xf32> to vector<8x32xf32>
    %119 = arith.mulf %116, %84 : vector<8x32xf32>
    %120 = arith.mulf %115, %117 : vector<8x32xf32>
    %121 = arith.addf %119, %120 : vector<8x32xf32>
    %122 = math.tanh %121 : vector<8x32xf32>
    %123 = arith.mulf %118, %122 : vector<8x32xf32>
    %124 = vector.extract_strided_slice %8 {offsets = [24, 0], sizes = [8, 128], strides = [1, 1]} : vector<64x128xf32> to vector<8x128xf32>
    %cst_27 = arith.constant dense<0.000000e+00> : vector<8x128xf32>
    %125 = tpu.matmul %104, %1, %cst_27 {dimension_numbers = #tpu.dot_dimension_numbers<[1], [0], [0], [1], [0, 0, 1, 1], [], []>} : vector<8x32xf32>, vector<32x128xf32>, vector<8x128xf32> -> vector<8x128xf32>
    %126 = arith.addf %124, %125 : vector<8x128xf32>
    %127 = arith.negf %126 : vector<8x128xf32>
    %128 = math.exp %127 : vector<8x128xf32>
    %cst_28 = arith.constant 1.000000e+00 : f32
    %129 = vector.broadcast %cst_28 : f32 to vector<8x128xf32>
    %130 = arith.addf %129, %128 : vector<8x128xf32>
    %131 = arith.divf %129, %130 : vector<8x128xf32>
    %132 = math.tanh %126 : vector<8x128xf32>
    %133 = vector.extract_strided_slice %131 {offsets = [0, 0], sizes = [8, 32], strides = [1, 1]} : vector<8x128xf32> to vector<8x32xf32>
    %134 = vector.extract_strided_slice %131 {offsets = [0, 32], sizes = [8, 32], strides = [1, 1]} : vector<8x128xf32> to vector<8x32xf32>
    %135 = vector.extract_strided_slice %132 {offsets = [0, 64], sizes = [8, 32], strides = [1, 1]} : vector<8x128xf32> to vector<8x32xf32>
    %136 = vector.extract_strided_slice %131 {offsets = [0, 96], sizes = [8, 32], strides = [1, 1]} : vector<8x128xf32> to vector<8x32xf32>
    %137 = arith.mulf %134, %102 : vector<8x32xf32>
    %138 = arith.mulf %133, %135 : vector<8x32xf32>
    %139 = arith.addf %137, %138 : vector<8x32xf32>
    %140 = math.tanh %139 : vector<8x32xf32>
    %141 = arith.mulf %136, %140 : vector<8x32xf32>
    %142 = tpu.concatenate %141, %123 in 1 : vector<8x32xf32>, vector<8x32xf32> -> vector<8x64xf32>
    %cst_29 = arith.constant dense<0.000000e+00> : vector<8x128xf32>
    %143 = tpu.matmul %142, %3, %cst_29 {dimension_numbers = #tpu.dot_dimension_numbers<[1], [0], [0], [1], [0, 0, 1, 1], [], []>} : vector<8x64xf32>, vector<64x128xf32>, vector<8x128xf32> -> vector<8x128xf32>
    %144 = vector.broadcast %4 : vector<1x128xf32> to vector<8x128xf32>
    %145 = arith.addf %143, %144 : vector<8x128xf32>
    %146 = arith.negf %145 : vector<8x128xf32>
    %147 = math.exp %146 : vector<8x128xf32>
    %cst_30 = arith.constant 1.000000e+00 : f32
    %148 = vector.broadcast %cst_30 : f32 to vector<8x128xf32>
    %149 = arith.addf %148, %147 : vector<8x128xf32>
    %150 = arith.divf %148, %149 : vector<8x128xf32>
    %151 = math.tanh %145 : vector<8x128xf32>
    %152 = vector.extract_strided_slice %150 {offsets = [0, 0], sizes = [8, 32], strides = [1, 1]} : vector<8x128xf32> to vector<8x32xf32>
    %153 = vector.extract_strided_slice %150 {offsets = [0, 32], sizes = [8, 32], strides = [1, 1]} : vector<8x128xf32> to vector<8x32xf32>
    %154 = vector.extract_strided_slice %151 {offsets = [0, 64], sizes = [8, 32], strides = [1, 1]} : vector<8x128xf32> to vector<8x32xf32>
    %155 = vector.extract_strided_slice %150 {offsets = [0, 96], sizes = [8, 32], strides = [1, 1]} : vector<8x128xf32> to vector<8x32xf32>
    %156 = arith.mulf %153, %121 : vector<8x32xf32>
    %157 = arith.mulf %152, %154 : vector<8x32xf32>
    %158 = arith.addf %156, %157 : vector<8x32xf32>
    %159 = math.tanh %158 : vector<8x32xf32>
    %160 = arith.mulf %155, %159 : vector<8x32xf32>
    %161 = vector.extract_strided_slice %8 {offsets = [32, 0], sizes = [8, 128], strides = [1, 1]} : vector<64x128xf32> to vector<8x128xf32>
    %cst_31 = arith.constant dense<0.000000e+00> : vector<8x128xf32>
    %162 = tpu.matmul %141, %1, %cst_31 {dimension_numbers = #tpu.dot_dimension_numbers<[1], [0], [0], [1], [0, 0, 1, 1], [], []>} : vector<8x32xf32>, vector<32x128xf32>, vector<8x128xf32> -> vector<8x128xf32>
    %163 = arith.addf %161, %162 : vector<8x128xf32>
    %164 = arith.negf %163 : vector<8x128xf32>
    %165 = math.exp %164 : vector<8x128xf32>
    %cst_32 = arith.constant 1.000000e+00 : f32
    %166 = vector.broadcast %cst_32 : f32 to vector<8x128xf32>
    %167 = arith.addf %166, %165 : vector<8x128xf32>
    %168 = arith.divf %166, %167 : vector<8x128xf32>
    %169 = math.tanh %163 : vector<8x128xf32>
    %170 = vector.extract_strided_slice %168 {offsets = [0, 0], sizes = [8, 32], strides = [1, 1]} : vector<8x128xf32> to vector<8x32xf32>
    %171 = vector.extract_strided_slice %168 {offsets = [0, 32], sizes = [8, 32], strides = [1, 1]} : vector<8x128xf32> to vector<8x32xf32>
    %172 = vector.extract_strided_slice %169 {offsets = [0, 64], sizes = [8, 32], strides = [1, 1]} : vector<8x128xf32> to vector<8x32xf32>
    %173 = vector.extract_strided_slice %168 {offsets = [0, 96], sizes = [8, 32], strides = [1, 1]} : vector<8x128xf32> to vector<8x32xf32>
    %174 = arith.mulf %171, %139 : vector<8x32xf32>
    %175 = arith.mulf %170, %172 : vector<8x32xf32>
    %176 = arith.addf %174, %175 : vector<8x32xf32>
    %177 = math.tanh %176 : vector<8x32xf32>
    %178 = arith.mulf %173, %177 : vector<8x32xf32>
    %179 = tpu.concatenate %178, %160 in 1 : vector<8x32xf32>, vector<8x32xf32> -> vector<8x64xf32>
    %cst_33 = arith.constant dense<0.000000e+00> : vector<8x128xf32>
    %180 = tpu.matmul %179, %3, %cst_33 {dimension_numbers = #tpu.dot_dimension_numbers<[1], [0], [0], [1], [0, 0, 1, 1], [], []>} : vector<8x64xf32>, vector<64x128xf32>, vector<8x128xf32> -> vector<8x128xf32>
    %181 = vector.broadcast %4 : vector<1x128xf32> to vector<8x128xf32>
    %182 = arith.addf %180, %181 : vector<8x128xf32>
    %183 = arith.negf %182 : vector<8x128xf32>
    %184 = math.exp %183 : vector<8x128xf32>
    %cst_34 = arith.constant 1.000000e+00 : f32
    %185 = vector.broadcast %cst_34 : f32 to vector<8x128xf32>
    %186 = arith.addf %185, %184 : vector<8x128xf32>
    %187 = arith.divf %185, %186 : vector<8x128xf32>
    %188 = math.tanh %182 : vector<8x128xf32>
    %189 = vector.extract_strided_slice %187 {offsets = [0, 0], sizes = [8, 32], strides = [1, 1]} : vector<8x128xf32> to vector<8x32xf32>
    %190 = vector.extract_strided_slice %187 {offsets = [0, 32], sizes = [8, 32], strides = [1, 1]} : vector<8x128xf32> to vector<8x32xf32>
    %191 = vector.extract_strided_slice %188 {offsets = [0, 64], sizes = [8, 32], strides = [1, 1]} : vector<8x128xf32> to vector<8x32xf32>
    %192 = vector.extract_strided_slice %187 {offsets = [0, 96], sizes = [8, 32], strides = [1, 1]} : vector<8x128xf32> to vector<8x32xf32>
    %193 = arith.mulf %190, %158 : vector<8x32xf32>
    %194 = arith.mulf %189, %191 : vector<8x32xf32>
    %195 = arith.addf %193, %194 : vector<8x32xf32>
    %196 = math.tanh %195 : vector<8x32xf32>
    %197 = arith.mulf %192, %196 : vector<8x32xf32>
    %198 = vector.extract_strided_slice %8 {offsets = [40, 0], sizes = [8, 128], strides = [1, 1]} : vector<64x128xf32> to vector<8x128xf32>
    %cst_35 = arith.constant dense<0.000000e+00> : vector<8x128xf32>
    %199 = tpu.matmul %178, %1, %cst_35 {dimension_numbers = #tpu.dot_dimension_numbers<[1], [0], [0], [1], [0, 0, 1, 1], [], []>} : vector<8x32xf32>, vector<32x128xf32>, vector<8x128xf32> -> vector<8x128xf32>
    %200 = arith.addf %198, %199 : vector<8x128xf32>
    %201 = arith.negf %200 : vector<8x128xf32>
    %202 = math.exp %201 : vector<8x128xf32>
    %cst_36 = arith.constant 1.000000e+00 : f32
    %203 = vector.broadcast %cst_36 : f32 to vector<8x128xf32>
    %204 = arith.addf %203, %202 : vector<8x128xf32>
    %205 = arith.divf %203, %204 : vector<8x128xf32>
    %206 = math.tanh %200 : vector<8x128xf32>
    %207 = vector.extract_strided_slice %205 {offsets = [0, 0], sizes = [8, 32], strides = [1, 1]} : vector<8x128xf32> to vector<8x32xf32>
    %208 = vector.extract_strided_slice %205 {offsets = [0, 32], sizes = [8, 32], strides = [1, 1]} : vector<8x128xf32> to vector<8x32xf32>
    %209 = vector.extract_strided_slice %206 {offsets = [0, 64], sizes = [8, 32], strides = [1, 1]} : vector<8x128xf32> to vector<8x32xf32>
    %210 = vector.extract_strided_slice %205 {offsets = [0, 96], sizes = [8, 32], strides = [1, 1]} : vector<8x128xf32> to vector<8x32xf32>
    %211 = arith.mulf %208, %176 : vector<8x32xf32>
    %212 = arith.mulf %207, %209 : vector<8x32xf32>
    %213 = arith.addf %211, %212 : vector<8x32xf32>
    %214 = math.tanh %213 : vector<8x32xf32>
    %215 = arith.mulf %210, %214 : vector<8x32xf32>
    %216 = tpu.concatenate %215, %197 in 1 : vector<8x32xf32>, vector<8x32xf32> -> vector<8x64xf32>
    %cst_37 = arith.constant dense<0.000000e+00> : vector<8x128xf32>
    %217 = tpu.matmul %216, %3, %cst_37 {dimension_numbers = #tpu.dot_dimension_numbers<[1], [0], [0], [1], [0, 0, 1, 1], [], []>} : vector<8x64xf32>, vector<64x128xf32>, vector<8x128xf32> -> vector<8x128xf32>
    %218 = vector.broadcast %4 : vector<1x128xf32> to vector<8x128xf32>
    %219 = arith.addf %217, %218 : vector<8x128xf32>
    %220 = arith.negf %219 : vector<8x128xf32>
    %221 = math.exp %220 : vector<8x128xf32>
    %cst_38 = arith.constant 1.000000e+00 : f32
    %222 = vector.broadcast %cst_38 : f32 to vector<8x128xf32>
    %223 = arith.addf %222, %221 : vector<8x128xf32>
    %224 = arith.divf %222, %223 : vector<8x128xf32>
    %225 = math.tanh %219 : vector<8x128xf32>
    %226 = vector.extract_strided_slice %224 {offsets = [0, 0], sizes = [8, 32], strides = [1, 1]} : vector<8x128xf32> to vector<8x32xf32>
    %227 = vector.extract_strided_slice %224 {offsets = [0, 32], sizes = [8, 32], strides = [1, 1]} : vector<8x128xf32> to vector<8x32xf32>
    %228 = vector.extract_strided_slice %225 {offsets = [0, 64], sizes = [8, 32], strides = [1, 1]} : vector<8x128xf32> to vector<8x32xf32>
    %229 = vector.extract_strided_slice %224 {offsets = [0, 96], sizes = [8, 32], strides = [1, 1]} : vector<8x128xf32> to vector<8x32xf32>
    %230 = arith.mulf %227, %195 : vector<8x32xf32>
    %231 = arith.mulf %226, %228 : vector<8x32xf32>
    %232 = arith.addf %230, %231 : vector<8x32xf32>
    %233 = math.tanh %232 : vector<8x32xf32>
    %234 = arith.mulf %229, %233 : vector<8x32xf32>
    %235 = vector.extract_strided_slice %8 {offsets = [48, 0], sizes = [8, 128], strides = [1, 1]} : vector<64x128xf32> to vector<8x128xf32>
    %cst_39 = arith.constant dense<0.000000e+00> : vector<8x128xf32>
    %236 = tpu.matmul %215, %1, %cst_39 {dimension_numbers = #tpu.dot_dimension_numbers<[1], [0], [0], [1], [0, 0, 1, 1], [], []>} : vector<8x32xf32>, vector<32x128xf32>, vector<8x128xf32> -> vector<8x128xf32>
    %237 = arith.addf %235, %236 : vector<8x128xf32>
    %238 = arith.negf %237 : vector<8x128xf32>
    %239 = math.exp %238 : vector<8x128xf32>
    %cst_40 = arith.constant 1.000000e+00 : f32
    %240 = vector.broadcast %cst_40 : f32 to vector<8x128xf32>
    %241 = arith.addf %240, %239 : vector<8x128xf32>
    %242 = arith.divf %240, %241 : vector<8x128xf32>
    %243 = math.tanh %237 : vector<8x128xf32>
    %244 = vector.extract_strided_slice %242 {offsets = [0, 0], sizes = [8, 32], strides = [1, 1]} : vector<8x128xf32> to vector<8x32xf32>
    %245 = vector.extract_strided_slice %242 {offsets = [0, 32], sizes = [8, 32], strides = [1, 1]} : vector<8x128xf32> to vector<8x32xf32>
    %246 = vector.extract_strided_slice %243 {offsets = [0, 64], sizes = [8, 32], strides = [1, 1]} : vector<8x128xf32> to vector<8x32xf32>
    %247 = vector.extract_strided_slice %242 {offsets = [0, 96], sizes = [8, 32], strides = [1, 1]} : vector<8x128xf32> to vector<8x32xf32>
    %248 = arith.mulf %245, %213 : vector<8x32xf32>
    %249 = arith.mulf %244, %246 : vector<8x32xf32>
    %250 = arith.addf %248, %249 : vector<8x32xf32>
    %251 = math.tanh %250 : vector<8x32xf32>
    %252 = arith.mulf %247, %251 : vector<8x32xf32>
    %253 = tpu.concatenate %252, %234 in 1 : vector<8x32xf32>, vector<8x32xf32> -> vector<8x64xf32>
    %cst_41 = arith.constant dense<0.000000e+00> : vector<8x128xf32>
    %254 = tpu.matmul %253, %3, %cst_41 {dimension_numbers = #tpu.dot_dimension_numbers<[1], [0], [0], [1], [0, 0, 1, 1], [], []>} : vector<8x64xf32>, vector<64x128xf32>, vector<8x128xf32> -> vector<8x128xf32>
    %255 = vector.broadcast %4 : vector<1x128xf32> to vector<8x128xf32>
    %256 = arith.addf %254, %255 : vector<8x128xf32>
    %257 = arith.negf %256 : vector<8x128xf32>
    %258 = math.exp %257 : vector<8x128xf32>
    %cst_42 = arith.constant 1.000000e+00 : f32
    %259 = vector.broadcast %cst_42 : f32 to vector<8x128xf32>
    %260 = arith.addf %259, %258 : vector<8x128xf32>
    %261 = arith.divf %259, %260 : vector<8x128xf32>
    %262 = math.tanh %256 : vector<8x128xf32>
    %263 = vector.extract_strided_slice %261 {offsets = [0, 0], sizes = [8, 32], strides = [1, 1]} : vector<8x128xf32> to vector<8x32xf32>
    %264 = vector.extract_strided_slice %261 {offsets = [0, 32], sizes = [8, 32], strides = [1, 1]} : vector<8x128xf32> to vector<8x32xf32>
    %265 = vector.extract_strided_slice %262 {offsets = [0, 64], sizes = [8, 32], strides = [1, 1]} : vector<8x128xf32> to vector<8x32xf32>
    %266 = vector.extract_strided_slice %261 {offsets = [0, 96], sizes = [8, 32], strides = [1, 1]} : vector<8x128xf32> to vector<8x32xf32>
    %267 = arith.mulf %264, %232 : vector<8x32xf32>
    %268 = arith.mulf %263, %265 : vector<8x32xf32>
    %269 = arith.addf %267, %268 : vector<8x32xf32>
    %270 = math.tanh %269 : vector<8x32xf32>
    %271 = arith.mulf %266, %270 : vector<8x32xf32>
    %272 = vector.extract_strided_slice %8 {offsets = [56, 0], sizes = [8, 128], strides = [1, 1]} : vector<64x128xf32> to vector<8x128xf32>
    %cst_43 = arith.constant dense<0.000000e+00> : vector<8x128xf32>
    %273 = tpu.matmul %252, %1, %cst_43 {dimension_numbers = #tpu.dot_dimension_numbers<[1], [0], [0], [1], [0, 0, 1, 1], [], []>} : vector<8x32xf32>, vector<32x128xf32>, vector<8x128xf32> -> vector<8x128xf32>
    %274 = arith.addf %272, %273 : vector<8x128xf32>
    %275 = arith.negf %274 : vector<8x128xf32>
    %276 = math.exp %275 : vector<8x128xf32>
    %cst_44 = arith.constant 1.000000e+00 : f32
    %277 = vector.broadcast %cst_44 : f32 to vector<8x128xf32>
    %278 = arith.addf %277, %276 : vector<8x128xf32>
    %279 = arith.divf %277, %278 : vector<8x128xf32>
    %280 = math.tanh %274 : vector<8x128xf32>
    %281 = vector.extract_strided_slice %279 {offsets = [0, 0], sizes = [8, 32], strides = [1, 1]} : vector<8x128xf32> to vector<8x32xf32>
    %282 = vector.extract_strided_slice %279 {offsets = [0, 32], sizes = [8, 32], strides = [1, 1]} : vector<8x128xf32> to vector<8x32xf32>
    %283 = vector.extract_strided_slice %280 {offsets = [0, 64], sizes = [8, 32], strides = [1, 1]} : vector<8x128xf32> to vector<8x32xf32>
    %284 = vector.extract_strided_slice %279 {offsets = [0, 96], sizes = [8, 32], strides = [1, 1]} : vector<8x128xf32> to vector<8x32xf32>
    %285 = arith.mulf %282, %250 : vector<8x32xf32>
    %286 = arith.mulf %281, %283 : vector<8x32xf32>
    %287 = arith.addf %285, %286 : vector<8x32xf32>
    %288 = math.tanh %287 : vector<8x32xf32>
    %289 = arith.mulf %284, %288 : vector<8x32xf32>
    %290 = tpu.concatenate %289, %271 in 1 : vector<8x32xf32>, vector<8x32xf32> -> vector<8x64xf32>
    %cst_45 = arith.constant dense<0.000000e+00> : vector<8x128xf32>
    %291 = tpu.matmul %290, %3, %cst_45 {dimension_numbers = #tpu.dot_dimension_numbers<[1], [0], [0], [1], [0, 0, 1, 1], [], []>} : vector<8x64xf32>, vector<64x128xf32>, vector<8x128xf32> -> vector<8x128xf32>
    %292 = vector.broadcast %4 : vector<1x128xf32> to vector<8x128xf32>
    %293 = arith.addf %291, %292 : vector<8x128xf32>
    %294 = arith.negf %293 : vector<8x128xf32>
    %295 = math.exp %294 : vector<8x128xf32>
    %cst_46 = arith.constant 1.000000e+00 : f32
    %296 = vector.broadcast %cst_46 : f32 to vector<8x128xf32>
    %297 = arith.addf %296, %295 : vector<8x128xf32>
    %298 = arith.divf %296, %297 : vector<8x128xf32>
    %299 = math.tanh %293 : vector<8x128xf32>
    %300 = vector.extract_strided_slice %298 {offsets = [0, 0], sizes = [8, 32], strides = [1, 1]} : vector<8x128xf32> to vector<8x32xf32>
    %301 = vector.extract_strided_slice %298 {offsets = [0, 32], sizes = [8, 32], strides = [1, 1]} : vector<8x128xf32> to vector<8x32xf32>
    %302 = vector.extract_strided_slice %299 {offsets = [0, 64], sizes = [8, 32], strides = [1, 1]} : vector<8x128xf32> to vector<8x32xf32>
    %303 = vector.extract_strided_slice %298 {offsets = [0, 96], sizes = [8, 32], strides = [1, 1]} : vector<8x128xf32> to vector<8x32xf32>
    %304 = arith.mulf %301, %269 : vector<8x32xf32>
    %305 = arith.mulf %300, %302 : vector<8x32xf32>
    %306 = arith.addf %304, %305 : vector<8x32xf32>
    %307 = math.tanh %306 : vector<8x32xf32>
    %308 = arith.mulf %303, %307 : vector<8x32xf32>
    %c0_47 = arith.constant 0 : index
    %c0_48 = arith.constant 0 : index
    %309 = vector.load %arg6[%c0_47, %c0_48] : memref<32x6xf32, #tpu.memory_space<vmem>>, vector<32x6xf32>
    %cst_49 = arith.constant dense<0.000000e+00> : vector<8x6xf32>
    %310 = tpu.matmul %308, %309, %cst_49 {dimension_numbers = #tpu.dot_dimension_numbers<[1], [0], [0], [1], [0, 0, 1, 1], [], []>} : vector<8x32xf32>, vector<32x6xf32>, vector<8x6xf32> -> vector<8x6xf32>
    %c0_50 = arith.constant 0 : index
    %c0_51 = arith.constant 0 : index
    %311 = vector.load %arg7[%c0_50, %c0_51] : memref<1x6xf32, #tpu.memory_space<vmem>>, vector<1x6xf32>
    %312 = vector.broadcast %311 : vector<1x6xf32> to vector<8x6xf32>
    %313 = arith.addf %310, %312 : vector<8x6xf32>
    %c0_52 = arith.constant 0 : index
    %c0_53 = arith.constant 0 : index
    %314 = vector.load %arg8[%c0_52, %c0_53] : memref<8x6xf32, #tpu.memory_space<vmem>>, vector<8x6xf32>
    tpu.vector_store %arg8[%c0_52, %c0_53], %313 {strides = array<i32>} : memref<8x6xf32, #tpu.memory_space<vmem>>, vector<8x6xf32>,
    return
  }
}

</mosaic_0001>

<llo_original>
// kernel: semg_lstm_forward.1
$region0: #{semg_lstm_forward.1}
  #allocation0 [shape = 'u32[]', space=smem, size = 0x4, offset = 0x4, fixed_abs, tag = 'smem constant byte address 0x4 - core index']
  #allocation1 [shape = 'u32[144,128]{1,0:T(1,128)}', space=vmem, size = 0x12000, scoped, tag = 'internal scratch']
  %s0 = inlined_call_operand.vmem [shape: f32[64,8], index: 0, kind: input, shape index: {}]
  %s1 = inlined_call_operand.vmem [shape: f32[8,128], index: 1, kind: input, shape index: {}]
  %s2 = inlined_call_operand.vmem [shape: f32[32,128], index: 2, kind: input, shape index: {}]
  %s3 = inlined_call_operand.vmem [shape: f32[1,128], index: 3, kind: input, shape index: {}]
  %s4 = inlined_call_operand.vmem [shape: f32[64,128], index: 4, kind: input, shape index: {}]
  %s5 = inlined_call_operand.vmem [shape: f32[1,128], index: 5, kind: input, shape index: {}]
  %s6 = inlined_call_operand.vmem [shape: f32[32,6], index: 6, kind: input, shape index: {}]
  %s7 = inlined_call_operand.vmem [shape: f32[1,6], index: 7, kind: input, shape index: {}]
  %s8 = inlined_call_operand.vmem [shape: f32[8,6], index: 8, kind: output, shape index: {}]
  %s9 = sld [smem:[#allocation0]]
  $region42: #{semg_lstm_forward.1} parent=0
    _
  %s11 = ssub.s32 1, %s9
  %s12 = scalar_select 0, %s11, %s9
  // Predicated region
  $region2: #{semg_lstm_forward.1} parent=0 // pred_check
    _
  $region3: #{semg_lstm_forward.1} parent=0 // pred_check_branch
    %14 = sbr.rel (0) target = $region5
  $region4: #{semg_lstm_forward.1} parent=0 // pred_region
    _
  $region5: #{semg_lstm_forward.1} parent=0 // pred_fallthru
    _
  // Predicated region
  $region6: #{semg_lstm_forward.1} parent=0 // pred_check
    _
  $region7: #{semg_lstm_forward.1} parent=0 // pred_check_branch
    %16 = sbr.rel (0) target = $region9
  $region8: #{semg_lstm_forward.1} parent=0 // pred_region
    _
  $region9: #{semg_lstm_forward.1} parent=0 // pred_fallthru
    _
  // Predicated region
  $region10: #{semg_lstm_forward.1} parent=0 // pred_check
    _
  $region11: #{semg_lstm_forward.1} parent=0 // pred_check_branch
    %18 = sbr.rel (0) target = $region13
  $region12: #{semg_lstm_forward.1} parent=0 // pred_region
    _
  $region13: #{semg_lstm_forward.1} parent=0 // pred_fallthru
    _
  // Predicated region
  $region14: #{semg_lstm_forward.1} parent=0 // pred_check
    _
  $region15: #{semg_lstm_forward.1} parent=0 // pred_check_branch
    %20 = sbr.rel (0) target = $region17
  $region16: #{semg_lstm_forward.1} parent=0 // pred_region
    _
  $region17: #{semg_lstm_forward.1} parent=0 // pred_fallthru
    _
  // Predicated region
  $region18: #{semg_lstm_forward.1} parent=0 // pred_check
    _
  $region19: #{semg_lstm_forward.1} parent=0 // pred_check_branch
    %22 = sbr.rel (0) target = $region21
  $region20: #{semg_lstm_forward.1} parent=0 // pred_region
    _
  $region21: #{semg_lstm_forward.1} parent=0 // pred_fallthru
    _
  // Predicated region
  $region22: #{semg_lstm_forward.1} parent=0 // pred_check
    _
  $region23: #{semg_lstm_forward.1} parent=0 // pred_check_branch
    %24 = sbr.rel (0) target = $region25
  $region24: #{semg_lstm_forward.1} parent=0 // pred_region
    _
  $region25: #{semg_lstm_forward.1} parent=0 // pred_fallthru
    _
  // Predicated region
  $region26: #{semg_lstm_forward.1} parent=0 // pred_check
    _
  $region27: #{semg_lstm_forward.1} parent=0 // pred_check_branch
    %26 = sbr.rel (0) target = $region29
  $region28: #{semg_lstm_forward.1} parent=0 // pred_region
    _
  $region29: #{semg_lstm_forward.1} parent=0 // pred_fallthru
    _
  // Predicated region
  $region30: #{semg_lstm_forward.1} parent=0 // pred_check
    _
  $region31: #{semg_lstm_forward.1} parent=0 // pred_check_branch
    %28 = sbr.rel (0) target = $region33
  $region32: #{semg_lstm_forward.1} parent=0 // pred_region
    _
  $region33: #{semg_lstm_forward.1} parent=0 // pred_fallthru
    _
  %v29 = vld [vmem:[%s1] sm:$0xff]
  %v30 = vld [vmem:[%s2] sm:$0xff]
  %v31 = vld [vmem:[%s2 + $0x8] sm:$0xff]
  %v32 = vld [vmem:[%s2 + $0x10] sm:$0xff]
  %v33 = vld [vmem:[%s2 + $0x18] sm:$0xff]
  %v34 = vld [vmem:[%s3] sm:$0x1]
  %v35 = vld [vmem:[%s4] sm:$0xff]
  %v36 = vld [vmem:[%s4 + $0x8] sm:$0xff]
  %v37 = vld [vmem:[%s4 + $0x10] sm:$0xff]
  %v38 = vld [vmem:[%s4 + $0x18] sm:$0xff]
  %v39 = vld [vmem:[%s4 + $0x20] sm:$0xff]
  %v40 = vld [vmem:[%s4 + $0x28] sm:$0xff]
  %v41 = vld [vmem:[%s4 + $0x30] sm:$0xff]
  %v42 = vld [vmem:[%s4 + $0x38] sm:$0xff]
  %v43 = vld [vmem:[%s5] sm:$0x1]
  %v44 = vld [vmem:[%s0] sm:$0xff]
  %v45 = vld [vmem:[%s0 + $0x8] sm:$0xff]
  %v46 = vld [vmem:[%s0 + $0x10] sm:$0xff]
  %v47 = vld [vmem:[%s0 + $0x18] sm:$0xff]
  %v48 = vld [vmem:[%s0 + $0x20] sm:$0xff]
  %v49 = vld [vmem:[%s0 + $0x28] sm:$0xff]
  %v50 = vld [vmem:[%s0 + $0x30] sm:$0xff]
  %v51 = vld [vmem:[%s0 + $0x38] sm:$0xff]
  %v53 = vlaneseq
  %v54 = vshrl.u32 %v53, 7
  %v55 = vsub.s32 0, %v54
  %v56 = vrot.slane %v34, %v55
  %vm58 = vcmask 64512
  %v60 = vsel %vm58, %v44, 0
  %v63 = vsel %vm58, %v45, 0
  %v66 = vsel %vm58, %v46, 0
  %v69 = vsel %vm58, %v47, 0
  %v72 = vsel %vm58, %v48, 0
  %v75 = vsel %vm58, %v49, 0
  %v78 = vsel %vm58, %v50, 0
  %v81 = vsel %vm58, %v51, 0
  %83 = vmatprep.subr.mxu0 0.0
  %84 = vmatpush1.msra.mxu0 0.0
  %85 = vmatprep.subr.mxu0 0.0
  %86 = vmatpush1.msra.mxu0 0.0
  %87 = vmatprep.subr.mxu0 0.0
  %88 = vmatpush1.msra.mxu0 0.0
  %89 = vmatprep.subr.mxu0 0.0
  %90 = vmatpush1.msra.mxu0 0.0
  %91 = vmatprep.subr.mxu0 0.0
  %92 = vmatpush1.msra.mxu0 0.0
  %93 = vmatprep.subr.mxu0 0.0
  %94 = vmatpush1.msra.mxu0 0.0
  %95 = vmatprep.subr.mxu0 0.0
  %96 = vmatpush1.msra.mxu0 0.0
  %97 = vmatprep.subr.mxu0 0.0
  %98 = vmatpush1.msra.mxu0 0.0
  %99 = vmatprep.subr.mxu0 0.0
  %100 = vmatpush1.msra.mxu0 0.0
  %101 = vmatprep.subr.mxu0 0.0
  %102 = vmatpush1.msra.mxu0 0.0
  %103 = vmatprep.subr.mxu0 0.0
  %104 = vmatpush1.msra.mxu0 0.0
  %105 = vmatprep.subr.mxu0 0.0
  %106 = vmatpush1.msra.mxu0 0.0
  %107 = vmatprep.subr.mxu0 0.0
  %108 = vmatpush1.msra.mxu0 0.0
  %109 = vmatprep.subr.mxu0 0.0
  %110 = vmatpush1.msra.mxu0 0.0
  %111 = vmatprep.subr.mxu0 0.0
  %112 = vmatpush1.msra.mxu0 0.0
  %113 = vmatprep.subr.mxu0 0.0
  %114 = vmatpush1.msra.mxu0 %v29
  %115 = vmatprep.subr.mxu0 0.0
  %116 = vmatpush2.msra.mxu0 0.0
  %117 = vmatprep.subr.mxu0 0.0
  %118 = vmatpush2.msra.mxu0 0.0
  %119 = vmatprep.subr.mxu0 0.0
  %120 = vmatpush2.msra.mxu0 0.0
  %121 = vmatprep.subr.mxu0 0.0
  %122 = vmatpush2.msra.mxu0 0.0
  %123 = vmatprep.subr.mxu0 0.0
  %124 = vmatpush2.msra.mxu0 0.0
  %125 = vmatprep.subr.mxu0 0.0
  %126 = vmatpush2.msra.mxu0 0.0
  %127 = vmatprep.subr.mxu0 0.0
  %128 = vmatpush2.msra.mxu0 0.0
  %129 = vmatprep.subr.mxu0 0.0
  %130 = vmatpush2.msra.mxu0 0.0
  %131 = vmatprep.subr.mxu0 0.0
  %132 = vmatpush2.msra.mxu0 0.0
  %133 = vmatprep.subr.mxu0 0.0
  %134 = vmatpush2.msra.mxu0 0.0
  %135 = vmatprep.subr.mxu0 0.0
  %136 = vmatpush2.msra.mxu0 0.0
  %137 = vmatprep.subr.mxu0 0.0
  %138 = vmatpush2.msra.mxu0 0.0
  %139 = vmatprep.subr.mxu0 0.0
  %140 = vmatpush2.msra.mxu0 0.0
  %141 = vmatprep.subr.mxu0 0.0
  %142 = vmatpush2.msra.mxu0 0.0
  %143 = vmatprep.subr.mxu0 0.0
  %144 = vmatpush2.msra.mxu0 0.0
  %145 = vmatprep.subr.mxu0 0.0
  %146 = vmatpush2.msra.mxu0 0.0
  %147 = vmatprep.mubr.f32.mxu0 0.0
  %148 = vmatmul.mubr.f32.gmra.mxu0 %v60
  %v149 = vpop.f32.mrf.mxu0
  %v150 = vadd.f32 %v56, %v149
  %v151 = vpop.f32.mrf.mxu0
  %152 = vmatprep.mubr.f32.mxu0 0.0
  %153 = vmatmul.mubr.f32.gmra.mxu0 %v63
  %v154 = vpop.f32.mrf.mxu0
  %v155 = vadd.f32 %v56, %v154
  %v156 = vpop.f32.mrf.mxu0
  %157 = vmatprep.mubr.f32.mxu0 0.0
  %158 = vmatmul.mubr.f32.gmra.mxu0 %v66
  %v159 = vpop.f32.mrf.mxu0
  %v160 = vadd.f32 %v56, %v159
  %v161 = vpop.f32.mrf.mxu0
  %162 = vmatprep.mubr.f32.mxu0 0.0
  %163 = vmatmul.mubr.f32.gmra.mxu0 %v69
  %v164 = vpop.f32.mrf.mxu0
  %v165 = vadd.f32 %v56, %v164
  %v166 = vpop.f32.mrf.mxu0
  %167 = vmatprep.mubr.f32.mxu0 0.0
  %168 = vmatmul.mubr.f32.gmra.mxu0 %v72
  %v169 = vpop.f32.mrf.mxu0
  %v170 = vadd.f32 %v56, %v169
  %v171 = vpop.f32.mrf.mxu0
  %172 = vmatprep.mubr.f32.mxu0 0.0
  %173 = vmatmul.mubr.f32.gmra.mxu0 %v75
  %v174 = vpop.f32.mrf.mxu0
  %v175 = vadd.f32 %v56, %v174
  %v176 = vpop.f32.mrf.mxu0
  %177 = vmatprep.mubr.f32.mxu0 0.0
  %178 = vmatmul.mubr.f32.gmra.mxu0 %v78
  %v179 = vpop.f32.mrf.mxu0
  %v180 = vadd.f32 %v56, %v179
  %v181 = vpop.f32.mrf.mxu0
  %182 = vmatprep.mubr.f32.mxu0 0.0
  %183 = vmatmul.mubr.f32.gmra.mxu0 %v81
  %v184 = vpop.f32.mrf.mxu0
  %v185 = vadd.f32 %v56, %v184
  %v186 = vpop.f32.mrf.mxu0
  %187 = vdwg.mxu0
  %vm188 = vcmask 261120
  %v190 = vsel %vm188, 0.0, 0
  %192 = vmatprep.subr.mxu0 0.0
  %193 = vmatpush1.msra.mxu0 0.0
  %194 = vmatprep.subr.mxu0 0.0
  %195 = vmatpush1.msra.mxu0 0.0
  %196 = vmatprep.subr.mxu0 0.0
  %197 = vmatpush1.msra.mxu0 0.0
  %198 = vmatprep.subr.mxu0 0.0
  %199 = vmatpush1.msra.mxu0 0.0
  %200 = vmatprep.subr.mxu0 0.0
  %201 = vmatpush1.msra.mxu0 0.0
  %202 = vmatprep.subr.mxu0 0.0
  %203 = vmatpush1.msra.mxu0 0.0
  %204 = vmatprep.subr.mxu0 0.0
  %205 = vmatpush1.msra.mxu0 0.0
  %206 = vmatprep.subr.mxu0 0.0
  %207 = vmatpush1.msra.mxu0 0.0
  %208 = vmatprep.subr.mxu0 0.0
  %209 = vmatpush1.msra.mxu0 0.0
  %210 = vmatprep.subr.mxu0 0.0
  %211 = vmatpush1.msra.mxu0 0.0
  %212 = vmatprep.subr.mxu0 0.0
  %213 = vmatpush1.msra.mxu0 0.0
  %214 = vmatprep.subr.mxu0 0.0
  %215 = vmatpush1.msra.mxu0 0.0
  %216 = vmatprep.subr.mxu0 0.0
  %217 = vmatpush1.msra.mxu0 %v33
  %218 = vmatprep.subr.mxu0 0.0
  %219 = vmatpush1.msra.mxu0 %v32
  %220 = vmatprep.subr.mxu0 0.0
  %221 = vmatpush1.msra.mxu0 %v31
  %222 = vmatprep.subr.mxu0 0.0
  %223 = vmatpush1.msra.mxu0 %v30
  %224 = vmatprep.subr.mxu0 0.0
  %225 = vmatpush2.msra.mxu0 0.0
  %226 = vmatprep.subr.mxu0 0.0
  %227 = vmatpush2.msra.mxu0 0.0
  %228 = vmatprep.subr.mxu0 0.0
  %229 = vmatpush2.msra.mxu0 0.0
  %230 = vmatprep.subr.mxu0 0.0
  %231 = vmatpush2.msra.mxu0 0.0
  %232 = vmatprep.subr.mxu0 0.0
  %233 = vmatpush2.msra.mxu0 0.0
  %234 = vmatprep.subr.mxu0 0.0
  %235 = vmatpush2.msra.mxu0 0.0
  %236 = vmatprep.subr.mxu0 0.0
  %237 = vmatpush2.msra.mxu0 0.0
  %238 = vmatprep.subr.mxu0 0.0
  %239 = vmatpush2.msra.mxu0 0.0
  %240 = vmatprep.subr.mxu0 0.0
  %241 = vmatpush2.msra.mxu0 0.0
  %242 = vmatprep.subr.mxu0 0.0
  %243 = vmatpush2.msra.mxu0 0.0
  %244 = vmatprep.subr.mxu0 0.0
  %245 = vmatpush2.msra.mxu0 0.0
  %246 = vmatprep.subr.mxu0 0.0
  %247 = vmatpush2.msra.mxu0 0.0
  %248 = vmatprep.subr.mxu0 0.0
  %249 = vmatpush2.msra.mxu0 0.0
  %250 = vmatprep.subr.mxu0 0.0
  %251 = vmatpush2.msra.mxu0 0.0
  %252 = vmatprep.subr.mxu0 0.0
  %253 = vmatpush2.msra.mxu0 0.0
  %254 = vmatprep.subr.mxu0 0.0
  %255 = vmatpush2.msra.mxu0 0.0
  %256 = vmatprep.mubr.f32.mxu0 0.0
  %257 = vmatmul.mubr.f32.gmra.mxu0 %v190
  %v258 = vpop.f32.mrf.mxu0
  %v259 = vadd.f32 0.0, %v258
  %v260 = vpop.f32.mrf.mxu0
  %261 = vdwg.mxu0
  %v262 = vadd.f32 %v150, %v259
  %v263 = vxor.u32 %v262, 2147483648
  %v264 = vmul.f32 %v263, 1.442695
  %v265 = vpow.pop %v264
  %v266 = vadd.f32 %v265, 1.0
  %v267 = vrcp.pop %v266
  %v268 = vmul.f32 1.0, %v267
  %v269 = vtanh.pop %v262
  %v270 = vmul.f32 %v268, 0.0
  %272 = vrot.lane.b32.xlu0 %v269, 64
  %v273 = vpop.permute.xlu0 %272
  %v275 = vmul.f32 %v268, %v273
  %277 = vrot.lane.b32.xlu0 %v275, 32
  %v278 = vpop.permute.xlu0 %277
  %v280 = vadd.f32 %v270, %v278
  %v281 = vtanh.pop %v280
  %283 = vrot.lane.b32.xlu0 %v281, 64
  %v284 = vpop.permute.xlu0 %283
  %v286 = vmul.f32 %v268, %v284
  %288 = vrot.lane.b32.xlu0 %v286, 32
  %v289 = vpop.permute.xlu0 %288
  %v291 = vsel %vm188, %v289, 0.0
  %v293 = vlaneseq
  %v294 = vshrl.u32 %v293, 7
  %v295 = vsub.s32 0, %v294
  %v296 = vrot.slane %v43, %v295
  %vm298 = vcmask 523264
  %v300 = vsel %vm298, %v291, 0
  %302 = vmatprep.subr.mxu0 0.0
  %303 = vmatpush1.msra.mxu0 0.0
  %304 = vmatprep.subr.mxu0 0.0
  %305 = vmatpush1.msra.mxu0 0.0
  %306 = vmatprep.subr.mxu0 0.0
  %307 = vmatpush1.msra.mxu0 0.0
  %308 = vmatprep.subr.mxu0 0.0
  %309 = vmatpush1.msra.mxu0 0.0
  %310 = vmatprep.subr.mxu0 0.0
  %311 = vmatpush1.msra.mxu0 0.0
  %312 = vmatprep.subr.mxu0 0.0
  %313 = vmatpush1.msra.mxu0 0.0
  %314 = vmatprep.subr.mxu0 0.0
  %315 = vmatpush1.msra.mxu0 0.0
  %316 = vmatprep.subr.mxu0 0.0
  %317 = vmatpush1.msra.mxu0 0.0
  %318 = vmatprep.subr.mxu0 0.0
  %319 = vmatpush1.msra.mxu0 %v42
  %320 = vmatprep.subr.mxu0 0.0
  %321 = vmatpush1.msra.mxu0 %v41
  %322 = vmatprep.subr.mxu0 0.0
  %323 = vmatpush1.msra.mxu0 %v40
  %324 = vmatprep.subr.mxu0 0.0
  %325 = vmatpush1.msra.mxu0 %v39
  %326 = vmatprep.subr.mxu0 0.0
  %327 = vmatpush1.msra.mxu0 %v38
  %328 = vmatprep.subr.mxu0 0.0
  %329 = vmatpush1.msra.mxu0 %v37
  %330 = vmatprep.subr.mxu0 0.0
  %331 = vmatpush1.msra.mxu0 %v36
  %332 = vmatprep.subr.mxu0 0.0
  %333 = vmatpush1.msra.mxu0 %v35
  %334 = vmatprep.subr.mxu0 0.0
  %335 = vmatpush2.msra.mxu0 0.0
  %336 = vmatprep.subr.mxu0 0.0
  %337 = vmatpush2.msra.mxu0 0.0
  %338 = vmatprep.subr.mxu0 0.0
  %339 = vmatpush2.msra.mxu0 0.0
  %340 = vmatprep.subr.mxu0 0.0
  %341 = vmatpush2.msra.mxu0 0.0
  %342 = vmatprep.subr.mxu0 0.0
  %343 = vmatpush2.msra.mxu0 0.0
  %344 = vmatprep.subr.mxu0 0.0
  %345 = vmatpush2.msra.mxu0 0.0
  %346 = vmatprep.subr.mxu0 0.0
  %347 = vmatpush2.msra.mxu0 0.0
  %348 = vmatprep.subr.mxu0 0.0
  %349 = vmatpush2.msra.mxu0 0.0
  %350 = vmatprep.subr.mxu0 0.0
  %351 = vmatpush2.msra.mxu0 0.0
  %352 = vmatprep.subr.mxu0 0.0
  %353 = vmatpush2.msra.mxu0 0.0
  %354 = vmatprep.subr.mxu0 0.0
  %355 = vmatpush2.msra.mxu0 0.0
  %356 = vmatprep.subr.mxu0 0.0
  %357 = vmatpush2.msra.mxu0 0.0
  %358 = vmatprep.subr.mxu0 0.0
  %359 = vmatpush2.msra.mxu0 0.0
  %360 = vmatprep.subr.mxu0 0.0
  %361 = vmatpush2.msra.mxu0 0.0
  %362 = vmatprep.subr.mxu0 0.0
  %363 = vmatpush2.msra.mxu0 0.0
  %364 = vmatprep.subr.mxu0 0.0
  %365 = vmatpush2.msra.mxu0 0.0
  %366 = vmatprep.mubr.f32.mxu0 0.0
  %367 = vmatmul.mubr.f32.gmra.mxu0 %v300
  %v368 = vpop.f32.mrf.mxu0
  %v369 = vadd.f32 %v296, %v368
  %v370 = vpop.f32.mrf.mxu0
  %371 = vdwg.mxu0
  %v372 = vxor.u32 %v369, 2147483648
  %v373 = vmul.f32 %v372, 1.442695
  %v374 = vpow.pop %v373
  %v375 = vadd.f32 %v374, 1.0
  %v376 = vrcp.pop %v375
  %v377 = vmul.f32 1.0, %v376
  %v378 = vtanh.pop %v369
  %v379 = vmul.f32 %v377, 0.0
  %381 = vrot.lane.b32.xlu0 %v378, 64
  %v382 = vpop.permute.xlu0 %381
  %v384 = vmul.f32 %v377, %v382
  %386 = vrot.lane.b32.xlu0 %v384, 32
  %v387 = vpop.permute.xlu0 %386
  %v389 = vadd.f32 %v379, %v387
  %v390 = vtanh.pop %v389
  %392 = vrot.lane.b32.xlu0 %v390, 64
  %v393 = vpop.permute.xlu0 %392
  %v395 = vmul.f32 %v377, %v393
  %v396 = vsel %vm188, %v289, 0
  %398 = vmatprep.subr.mxu0 0.0
  %399 = vmatpush1.msra.mxu0 0.0
  %400 = vmatprep.subr.mxu0 0.0
  %401 = vmatpush1.msra.mxu0 0.0
  %402 = vmatprep.subr.mxu0 0.0
  %403 = vmatpush1.msra.mxu0 0.0
  %404 = vmatprep.subr.mxu0 0.0
  %405 = vmatpush1.msra.mxu0 0.0
  %406 = vmatprep.subr.mxu0 0.0
  %407 = vmatpush1.msra.mxu0 0.0
  %408 = vmatprep.subr.mxu0 0.0
  %409 = vmatpush1.msra.mxu0 0.0
  %410 = vmatprep.subr.mxu0 0.0
  %411 = vmatpush1.msra.mxu0 0.0
  %412 = vmatprep.subr.mxu0 0.0
  %413 = vmatpush1.msra.mxu0 0.0
  %414 = vmatprep.subr.mxu0 0.0
  %415 = vmatpush1.msra.mxu0 0.0
  %416 = vmatprep.subr.mxu0 0.0
  %417 = vmatpush1.msra.mxu0 0.0
  %418 = vmatprep.subr.mxu0 0.0
  %419 = vmatpush1.msra.mxu0 0.0
  %420 = vmatprep.subr.mxu0 0.0
  %421 = vmatpush1.msra.mxu0 0.0
  %422 = vmatprep.subr.mxu0 0.0
  %423 = vmatpush1.msra.mxu0 %v33
  %424 = vmatprep.subr.mxu0 0.0
  %425 = vmatpush1.msra.mxu0 %v32
  %426 = vmatprep.subr.mxu0 0.0
  %427 = vmatpush1.msra.mxu0 %v31
  %428 = vmatprep.subr.mxu0 0.0
  %429 = vmatpush1.msra.mxu0 %v30
  %430 = vmatprep.subr.mxu0 0.0
  %431 = vmatpush2.msra.mxu0 0.0
  %432 = vmatprep.subr.mxu0 0.0
  %433 = vmatpush2.msra.mxu0 0.0
  %434 = vmatprep.subr.mxu0 0.0
  %435 = vmatpush2.msra.mxu0 0.0
  %436 = vmatprep.subr.mxu0 0.0
  %437 = vmatpush2.msra.mxu0 0.0
  %438 = vmatprep.subr.mxu0 0.0
  %439 = vmatpush2.msra.mxu0 0.0
  %440 = vmatprep.subr.mxu0 0.0
  %441 = vmatpush2.msra.mxu0 0.0
  %442 = vmatprep.subr.mxu0 0.0
  %443 = vmatpush2.msra.mxu0 0.0
  %444 = vmatprep.subr.mxu0 0.0
  %445 = vmatpush2.msra.mxu0 0.0
  %446 = vmatprep.subr.mxu0 0.0
  %447 = vmatpush2.msra.mxu0 0.0
  %448 = vmatprep.subr.mxu0 0.0
  %449 = vmatpush2.msra.mxu0 0.0
  %450 = vmatprep.subr.mxu0 0.0
  %451 = vmatpush2.msra.mxu0 0.0
  %452 = vmatprep.subr.mxu0 0.0
  %453 = vmatpush2.msra.mxu0 0.0
  %454 = vmatprep.subr.mxu0 0.0
  %455 = vmatpush2.msra.mxu0 0.0
  %456 = vmatprep.subr.mxu0 0.0
  %457 = vmatpush2.msra.mxu0 0.0
  %458 = vmatprep.subr.mxu0 0.0
  %459 = vmatpush2.msra.mxu0 0.0
  %460 = vmatprep.subr.mxu0 0.0
  %461 = vmatpush2.msra.mxu0 0.0
  %462 = vmatprep.mubr.f32.mxu0 0.0
  %463 = vmatmul.mubr.f32.gmra.mxu0 %v396
  %v464 = vpop.f32.mrf.mxu0
  %v465 = vadd.f32 0.0, %v464
  %v466 = vpop.f32.mrf.mxu0
  %467 = vdwg.mxu0
  %v468 = vadd.f32 %v155, %v465
  %v469 = vxor.u32 %v468, 2147483648
  %v470 = vmul.f32 %v469, 1.442695
  %v471 = vpow.pop %v470
  %v472 = vadd.f32 %v471, 1.0
  %v473 = vrcp.pop %v472
  %v474 = vmul.f32 1.0, %v473
  %v475 = vtanh.pop %v468
  %v476 = vmul.f32 %v474, %v280
  %478 = vrot.lane.b32.xlu0 %v475, 64
  %v479 = vpop.permute.xlu0 %478
  %v481 = vmul.f32 %v474, %v479
  %483 = vrot.lane.b32.xlu0 %v481, 32
  %v484 = vpop.permute.xlu0 %483
  %v486 = vadd.f32 %v476, %v484
  %v487 = vtanh.pop %v486
  %489 = vrot.lane.b32.xlu0 %v487, 64
  %v490 = vpop.permute.xlu0 %489
  %v492 = vmul.f32 %v474, %v490
  %494 = vrot.lane.b32.xlu0 %v492, 32
  %v495 = vpop.permute.xlu0 %494
  %498 = vrot.lane.b32.xlu0 %v395, 64
  %v499 = vpop.permute.xlu0 %498
  %v501 = vsel %vm188, %v495, %v499
  %v503 = vsel %vm298, %v501, 0
  %505 = vmatprep.subr.mxu0 0.0
  %506 = vmatpush1.msra.mxu0 0.0
  %507 = vmatprep.subr.mxu0 0.0
  %508 = vmatpush1.msra.mxu0 0.0
  %509 = vmatprep.subr.mxu0 0.0
  %510 = vmatpush1.msra.mxu0 0.0
  %511 = vmatprep.subr.mxu0 0.0
  %512 = vmatpush1.msra.mxu0 0.0
  %513 = vmatprep.subr.mxu0 0.0
  %514 = vmatpush1.msra.mxu0 0.0
  %515 = vmatprep.subr.mxu0 0.0
  %516 = vmatpush1.msra.mxu0 0.0
  %517 = vmatprep.subr.mxu0 0.0
  %518 = vmatpush1.msra.mxu0 0.0
  %519 = vmatprep.subr.mxu0 0.0
  %520 = vmatpush1.msra.mxu0 0.0
  %521 = vmatprep.subr.mxu0 0.0
  %522 = vmatpush1.msra.mxu0 %v42
  %523 = vmatprep.subr.mxu0 0.0
  %524 = vmatpush1.msra.mxu0 %v41
  %525 = vmatprep.subr.mxu0 0.0
  %526 = vmatpush1.msra.mxu0 %v40
  %527 = vmatprep.subr.mxu0 0.0
  %528 = vmatpush1.msra.mxu0 %v39
  %529 = vmatprep.subr.mxu0 0.0
  %530 = vmatpush1.msra.mxu0 %v38
  %531 = vmatprep.subr.mxu0 0.0
  %532 = vmatpush1.msra.mxu0 %v37
  %533 = vmatprep.subr.mxu0 0.0
  %534 = vmatpush1.msra.mxu0 %v36
  %535 = vmatprep.subr.mxu0 0.0
  %536 = vmatpush1.msra.mxu0 %v35
  %537 = vmatprep.subr.mxu0 0.0
  %538 = vmatpush2.msra.mxu0 0.0
  %539 = vmatprep.subr.mxu0 0.0
  %540 = vmatpush2.msra.mxu0 0.0
  %541 = vmatprep.subr.mxu0 0.0
  %542 = vmatpush2.msra.mxu0 0.0
  %543 = vmatprep.subr.mxu0 0.0
  %544 = vmatpush2.msra.mxu0 0.0
  %545 = vmatprep.subr.mxu0 0.0
  %546 = vmatpush2.msra.mxu0 0.0
  %547 = vmatprep.subr.mxu0 0.0
  %548 = vmatpush2.msra.mxu0 0.0
  %549 = vmatprep.subr.mxu0 0.0
  %550 = vmatpush2.msra.mxu0 0.0
  %551 = vmatprep.subr.mxu0 0.0
  %552 = vmatpush2.msra.mxu0 0.0
  %553 = vmatprep.subr.mxu0 0.0
  %554 = vmatpush2.msra.mxu0 0.0
  %555 = vmatprep.subr.mxu0 0.0
  %556 = vmatpush2.msra.mxu0 0.0
  %557 = vmatprep.subr.mxu0 0.0
  %558 = vmatpush2.msra.mxu0 0.0
  %559 = vmatprep.subr.mxu0 0.0
  %560 = vmatpush2.msra.mxu0 0.0
  %561 = vmatprep.subr.mxu0 0.0
  %562 = vmatpush2.msra.mxu0 0.0
  %563 = vmatprep.subr.mxu0 0.0
  %564 = vmatpush2.msra.mxu0 0.0
  %565 = vmatprep.subr.mxu0 0.0
  %566 = vmatpush2.msra.mxu0 0.0
  %567 = vmatprep.subr.mxu0 0.0
  %568 = vmatpush2.msra.mxu0 0.0
  %569 = vmatprep.mubr.f32.mxu0 0.0
  %570 = vmatmul.mubr.f32.gmra.mxu0 %v503
  %v571 = vpop.f32.mrf.mxu0
  %v572 = vadd.f32 %v296, %v571
  %v573 = vpop.f32.mrf.mxu0
  %574 = vdwg.mxu0
  %v575 = vxor.u32 %v572, 2147483648
  %v576 = vmul.f32 %v575, 1.442695
  %v577 = vpow.pop %v576
  %v578 = vadd.f32 %v577, 1.0
  %v579 = vrcp.pop %v578
  %v580 = vmul.f32 1.0, %v579
  %v581 = vtanh.pop %v572
  %v582 = vmul.f32 %v580, %v389
  %584 = vrot.lane.b32.xlu0 %v581, 64
  %v585 = vpop.permute.xlu0 %584
  %v587 = vmul.f32 %v580, %v585
  %589 = vrot.lane.b32.xlu0 %v587, 32
  %v590 = vpop.permute.xlu0 %589
  %v592 = vadd.f32 %v582, %v590
  %v593 = vtanh.pop %v592
  %595 = vrot.lane.b32.xlu0 %v593, 64
  %v596 = vpop.permute.xlu0 %595
  %v598 = vmul.f32 %v580, %v596
  %v599 = vsel %vm188, %v495, 0
  %601 = vmatprep.subr.mxu0 0.0
  %602 = vmatpush1.msra.mxu0 0.0
  %603 = vmatprep.subr.mxu0 0.0
  %604 = vmatpush1.msra.mxu0 0.0
  %605 = vmatprep.subr.mxu0 0.0
  %606 = vmatpush1.msra.mxu0 0.0
  %607 = vmatprep.subr.mxu0 0.0
  %608 = vmatpush1.msra.mxu0 0.0
  %609 = vmatprep.subr.mxu0 0.0
  %610 = vmatpush1.msra.mxu0 0.0
  %611 = vmatprep.subr.mxu0 0.0
  %612 = vmatpush1.msra.mxu0 0.0
  %613 = vmatprep.subr.mxu0 0.0
  %614 = vmatpush1.msra.mxu0 0.0
  %615 = vmatprep.subr.mxu0 0.0
  %616 = vmatpush1.msra.mxu0 0.0
  %617 = vmatprep.subr.mxu0 0.0
  %618 = vmatpush1.msra.mxu0 0.0
  %619 = vmatprep.subr.mxu0 0.0
  %620 = vmatpush1.msra.mxu0 0.0
  %621 = vmatprep.subr.mxu0 0.0
  %622 = vmatpush1.msra.mxu0 0.0
  %623 = vmatprep.subr.mxu0 0.0
  %624 = vmatpush1.msra.mxu0 0.0
  %625 = vmatprep.subr.mxu0 0.0
  %626 = vmatpush1.msra.mxu0 %v33
  %627 = vmatprep.subr.mxu0 0.0
  %628 = vmatpush1.msra.mxu0 %v32
  %629 = vmatprep.subr.mxu0 0.0
  %630 = vmatpush1.msra.mxu0 %v31
  %631 = vmatprep.subr.mxu0 0.0
  %632 = vmatpush1.msra.mxu0 %v30
  %633 = vmatprep.subr.mxu0 0.0
  %634 = vmatpush2.msra.mxu0 0.0
  %635 = vmatprep.subr.mxu0 0.0
  %636 = vmatpush2.msra.mxu0 0.0
  %637 = vmatprep.subr.mxu0 0.0
  %638 = vmatpush2.msra.mxu0 0.0
  %639 = vmatprep.subr.mxu0 0.0
  %640 = vmatpush2.msra.mxu0 0.0
  %641 = vmatprep.subr.mxu0 0.0
  %642 = vmatpush2.msra.mxu0 0.0
  %643 = vmatprep.subr.mxu0 0.0
  %644 = vmatpush2.msra.mxu0 0.0
  %645 = vmatprep.subr.mxu0 0.0
  %646 = vmatpush2.msra.mxu0 0.0
  %647 = vmatprep.subr.mxu0 0.0
  %648 = vmatpush2.msra.mxu0 0.0
  %649 = vmatprep.subr.mxu0 0.0
  %650 = vmatpush2.msra.mxu0 0.0
  %651 = vmatprep.subr.mxu0 0.0
  %652 = vmatpush2.msra.mxu0 0.0
  %653 = vmatprep.subr.mxu0 0.0
  %654 = vmatpush2.msra.mxu0 0.0
  %655 = vmatprep.subr.mxu0 0.0
  %656 = vmatpush2.msra.mxu0 0.0
  %657 = vmatprep.subr.mxu0 0.0
  %658 = vmatpush2.msra.mxu0 0.0
  %659 = vmatprep.subr.mxu0 0.0
  %660 = vmatpush2.msra.mxu0 0.0
  %661 = vmatprep.subr.mxu0 0.0
  %662 = vmatpush2.msra.mxu0 0.0
  %663 = vmatprep.subr.mxu0 0.0
  %664 = vmatpush2.msra.mxu0 0.0
  %665 = vmatprep.mubr.f32.mxu0 0.0
  %666 = vmatmul.mubr.f32.gmra.mxu0 %v599
  %v667 = vpop.f32.mrf.mxu0
  %v668 = vadd.f32 0.0, %v667
  %v669 = vpop.f32.mrf.mxu0
  %670 = vdwg.mxu0
  %v671 = vadd.f32 %v160, %v668
  %v672 = vxor.u32 %v671, 2147483648
  %v673 = vmul.f32 %v672, 1.442695
  %v674 = vpow.pop %v673
  %v675 = vadd.f32 %v674, 1.0
  %v676 = vrcp.pop %v675
  %v677 = vmul.f32 1.0, %v676
  %v678 = vtanh.pop %v671
  %v679 = vmul.f32 %v677, %v486
  %681 = vrot.lane.b32.xlu0 %v678, 64
  %v682 = vpop.permute.xlu0 %681
  %v684 = vmul.f32 %v677, %v682
  %686 = vrot.lane.b32.xlu0 %v684, 32
  %v687 = vpop.permute.xlu0 %686
  %v689 = vadd.f32 %v679, %v687
  %v690 = vtanh.pop %v689
  %692 = vrot.lane.b32.xlu0 %v690, 64
  %v693 = vpop.permute.xlu0 %692
  %v695 = vmul.f32 %v677, %v693
  %697 = vrot.lane.b32.xlu0 %v695, 32
  %v698 = vpop.permute.xlu0 %697
  %701 = vrot.lane.b32.xlu0 %v598, 64
  %v702 = vpop.permute.xlu0 %701
  %v704 = vsel %vm188, %v698, %v702
  %v706 = vsel %vm298, %v704, 0
  %708 = vmatprep.subr.mxu0 0.0
  %709 = vmatpush1.msra.mxu0 0.0
  %710 = vmatprep.subr.mxu0 0.0
  %711 = vmatpush1.msra.mxu0 0.0
  %712 = vmatprep.subr.mxu0 0.0
  %713 = vmatpush1.msra.mxu0 0.0
  %714 = vmatprep.subr.mxu0 0.0
  %715 = vmatpush1.msra.mxu0 0.0
  %716 = vmatprep.subr.mxu0 0.0
  %717 = vmatpush1.msra.mxu0 0.0
  %718 = vmatprep.subr.mxu0 0.0
  %719 = vmatpush1.msra.mxu0 0.0
  %720 = vmatprep.subr.mxu0 0.0
  %721 = vmatpush1.msra.mxu0 0.0
  %722 = vmatprep.subr.mxu0 0.0
  %723 = vmatpush1.msra.mxu0 0.0
  %724 = vmatprep.subr.mxu0 0.0
  %725 = vmatpush1.msra.mxu0 %v42
  %726 = vmatprep.subr.mxu0 0.0
  %727 = vmatpush1.msra.mxu0 %v41
  %728 = vmatprep.subr.mxu0 0.0
  %729 = vmatpush1.msra.mxu0 %v40
  %730 = vmatprep.subr.mxu0 0.0
  %731 = vmatpush1.msra.mxu0 %v39
  %732 = vmatprep.subr.mxu0 0.0
  %733 = vmatpush1.msra.mxu0 %v38
  %734 = vmatprep.subr.mxu0 0.0
  %735 = vmatpush1.msra.mxu0 %v37
  %736 = vmatprep.subr.mxu0 0.0
  %737 = vmatpush1.msra.mxu0 %v36
  %738 = vmatprep.subr.mxu0 0.0
  %739 = vmatpush1.msra.mxu0 %v35
  %740 = vmatprep.subr.mxu0 0.0
  %741 = vmatpush2.msra.mxu0 0.0
  %742 = vmatprep.subr.mxu0 0.0
  %743 = vmatpush2.msra.mxu0 0.0
  %744 = vmatprep.subr.mxu0 0.0
  %745 = vmatpush2.msra.mxu0 0.0
  %746 = vmatprep.subr.mxu0 0.0
  %747 = vmatpush2.msra.mxu0 0.0
  %748 = vmatprep.subr.mxu0 0.0
  %749 = vmatpush2.msra.mxu0 0.0
  %750 = vmatprep.subr.mxu0 0.0
  %751 = vmatpush2.msra.mxu0 0.0
  %752 = vmatprep.subr.mxu0 0.0
  %753 = vmatpush2.msra.mxu0 0.0
  %754 = vmatprep.subr.mxu0 0.0
  %755 = vmatpush2.msra.mxu0 0.0
  %756 = vmatprep.subr.mxu0 0.0
  %757 = vmatpush2.msra.mxu0 0.0
  %758 = vmatprep.subr.mxu0 0.0
  %759 = vmatpush2.msra.mxu0 0.0
  %760 = vmatprep.subr.mxu0 0.0
  %761 = vmatpush2.msra.mxu0 0.0
  %762 = vmatprep.subr.mxu0 0.0
  %763 = vmatpush2.msra.mxu0 0.0
  %764 = vmatprep.subr.mxu0 0.0
  %765 = vmatpush2.msra.mxu0 0.0
  %766 = vmatprep.subr.mxu0 0.0
  %767 = vmatpush2.msra.mxu0 0.0
  %768 = vmatprep.subr.mxu0 0.0
  %769 = vmatpush2.msra.mxu0 0.0
  %770 = vmatprep.subr.mxu0 0.0
  %771 = vmatpush2.msra.mxu0 0.0
  %772 = vmatprep.mubr.f32.mxu0 0.0
  %773 = vmatmul.mubr.f32.gmra.mxu0 %v706
  %v774 = vpop.f32.mrf.mxu0
  %v775 = vadd.f32 %v296, %v774
  %v776 = vpop.f32.mrf.mxu0
  %777 = vdwg.mxu0
  %v778 = vxor.u32 %v775, 2147483648
  %v779 = vmul.f32 %v778, 1.442695
  %v780 = vpow.pop %v779
  %v781 = vadd.f32 %v780, 1.0
  %v782 = vrcp.pop %v781
  %v783 = vmul.f32 1.0, %v782
  %v784 = vtanh.pop %v775
  %v785 = vmul.f32 %v783, %v592
  %787 = vrot.lane.b32.xlu0 %v784, 64
  %v788 = vpop.permute.xlu0 %787
  %v790 = vmul.f32 %v783, %v788
  %792 = vrot.lane.b32.xlu0 %v790, 32
  %v793 = vpop.permute.xlu0 %792
  %v795 = vadd.f32 %v785, %v793
  %v796 = vtanh.pop %v795
  %798 = vrot.lane.b32.xlu0 %v796, 64
  %v799 = vpop.permute.xlu0 %798
  %v801 = vmul.f32 %v783, %v799
  %v802 = vsel %vm188, %v698, 0
  %804 = vmatprep.subr.mxu0 0.0
  %805 = vmatpush1.msra.mxu0 0.0
  %806 = vmatprep.subr.mxu0 0.0
  %807 = vmatpush1.msra.mxu0 0.0
  %808 = vmatprep.subr.mxu0 0.0
  %809 = vmatpush1.msra.mxu0 0.0
  %810 = vmatprep.subr.mxu0 0.0
  %811 = vmatpush1.msra.mxu0 0.0
  %812 = vmatprep.subr.mxu0 0.0
  %813 = vmatpush1.msra.mxu0 0.0
  %814 = vmatprep.subr.mxu0 0.0
  %815 = vmatpush1.msra.mxu0 0.0
  %816 = vmatprep.subr.mxu0 0.0
  %817 = vmatpush1.msra.mxu0 0.0
  %818 = vmatprep.subr.mxu0 0.0
  %819 = vmatpush1.msra.mxu0 0.0
  %820 = vmatprep.subr.mxu0 0.0
  %821 = vmatpush1.msra.mxu0 0.0
  %822 = vmatprep.subr.mxu0 0.0
  %823 = vmatpush1.msra.mxu0 0.0
  %824 = vmatprep.subr.mxu0 0.0
  %825 = vmatpush1.msra.mxu0 0.0
  %826 = vmatprep.subr.mxu0 0.0
  %827 = vmatpush1.msra.mxu0 0.0
  %828 = vmatprep.subr.mxu0 0.0
  %829 = vmatpush1.msra.mxu0 %v33
  %830 = vmatprep.subr.mxu0 0.0
  %831 = vmatpush1.msra.mxu0 %v32
  %832 = vmatprep.subr.mxu0 0.0
  %833 = vmatpush1.msra.mxu0 %v31
  %834 = vmatprep.subr.mxu0 0.0
  %835 = vmatpush1.msra.mxu0 %v30
  %836 = vmatprep.subr.mxu0 0.0
  %837 = vmatpush2.msra.mxu0 0.0
  %838 = vmatprep.subr.mxu0 0.0
  %839 = vmatpush2.msra.mxu0 0.0
  %840 = vmatprep.subr.mxu0 0.0
  %841 = vmatpush2.msra.mxu0 0.0
  %842 = vmatprep.subr.mxu0 0.0
  %843 = vmatpush2.msra.mxu0 0.0
  %844 = vmatprep.subr.mxu0 0.0
  %845 = vmatpush2.msra.mxu0 0.0
  %846 = vmatprep.subr.mxu0 0.0
  %847 = vmatpush2.msra.mxu0 0.0
  %848 = vmatprep.subr.mxu0 0.0
  %849 = vmatpush2.msra.mxu0 0.0
  %850 = vmatprep.subr.mxu0 0.0
  %851 = vmatpush2.msra.mxu0 0.0
  %852 = vmatprep.subr.mxu0 0.0
  %853 = vmatpush2.msra.mxu0 0.0
  %854 = vmatprep.subr.mxu0 0.0
  %855 = vmatpush2.msra.mxu0 0.0
  %856 = vmatprep.subr.mxu0 0.0
  %857 = vmatpush2.msra.mxu0 0.0
  %858 = vmatprep.subr.mxu0 0.0
  %859 = vmatpush2.msra.mxu0 0.0
  %860 = vmatprep.subr.mxu0 0.0
  %861 = vmatpush2.msra.mxu0 0.0
  %862 = vmatprep.subr.mxu0 0.0
  %863 = vmatpush2.msra.mxu0 0.0
  %864 = vmatprep.subr.mxu0 0.0
  %865 = vmatpush2.msra.mxu0 0.0
  %866 = vmatprep.subr.mxu0 0.0
  %867 = vmatpush2.msra.mxu0 0.0
  %868 = vmatprep.mubr.f32.mxu0 0.0
  %869 = vmatmul.mubr.f32.gmra.mxu0 %v802
  %v870 = vpop.f32.mrf.mxu0
  %v871 = vadd.f32 0.0, %v870
  %v872 = vpop.f32.mrf.mxu0
  %873 = vdwg.mxu0
  %v874 = vadd.f32 %v165, %v871
  %v875 = vxor.u32 %v874, 2147483648
  %v876 = vmul.f32 %v875, 1.442695
  %v877 = vpow.pop %v876
  %v878 = vadd.f32 %v877, 1.0
  %v879 = vrcp.pop %v878
  %v880 = vmul.f32 1.0, %v879
  %v881 = vtanh.pop %v874
  %v882 = vmul.f32 %v880, %v689
  %884 = vrot.lane.b32.xlu0 %v881, 64
  %v885 = vpop.permute.xlu0 %884
  %v887 = vmul.f32 %v880, %v885
  %889 = vrot.lane.b32.xlu0 %v887, 32
  %v890 = vpop.permute.xlu0 %889
  %v892 = vadd.f32 %v882, %v890
  %v893 = vtanh.pop %v892
  %895 = vrot.lane.b32.xlu0 %v893, 64
  %v896 = vpop.permute.xlu0 %895
  %v898 = vmul.f32 %v880, %v896
  %900 = vrot.lane.b32.xlu0 %v898, 32
  %v901 = vpop.permute.xlu0 %900
  %904 = vrot.lane.b32.xlu0 %v801, 64
  %v905 = vpop.permute.xlu0 %904
  %v907 = vsel %vm188, %v901, %v905
  %v909 = vsel %vm298, %v907, 0
  %911 = vmatprep.subr.mxu0 0.0
  %912 = vmatpush1.msra.mxu0 0.0
  %913 = vmatprep.subr.mxu0 0.0
  %914 = vmatpush1.msra.mxu0 0.0
  %915 = vmatprep.subr.mxu0 0.0
  %916 = vmatpush1.msra.mxu0 0.0
  %917 = vmatprep.subr.mxu0 0.0
  %918 = vmatpush1.msra.mxu0 0.0
  %919 = vmatprep.subr.mxu0 0.0
  %920 = vmatpush1.msra.mxu0 0.0
  %921 = vmatprep.subr.mxu0 0.0
  %922 = vmatpush1.msra.mxu0 0.0
  %923 = vmatprep.subr.mxu0 0.0
  %924 = vmatpush1.msra.mxu0 0.0
  %925 = vmatprep.subr.mxu0 0.0
  %926 = vmatpush1.msra.mxu0 0.0
  %927 = vmatprep.subr.mxu0 0.0
  %928 = vmatpush1.msra.mxu0 %v42
  %929 = vmatprep.subr.mxu0 0.0
  %930 = vmatpush1.msra.mxu0 %v41
  %931 = vmatprep.subr.mxu0 0.0
  %932 = vmatpush1.msra.mxu0 %v40
  %933 = vmatprep.subr.mxu0 0.0
  %934 = vmatpush1.msra.mxu0 %v39
  %935 = vmatprep.subr.mxu0 0.0
  %936 = vmatpush1.msra.mxu0 %v38
  %937 = vmatprep.subr.mxu0 0.0
  %938 = vmatpush1.msra.mxu0 %v37
  %939 = vmatprep.subr.mxu0 0.0
  %940 = vmatpush1.msra.mxu0 %v36
  %941 = vmatprep.subr.mxu0 0.0
  %942 = vmatpush1.msra.mxu0 %v35
  %943 = vmatprep.subr.mxu0 0.0
  %944 = vmatpush2.msra.mxu0 0.0
  %945 = vmatprep.subr.mxu0 0.0
  %946 = vmatpush2.msra.mxu0 0.0
  %947 = vmatprep.subr.mxu0 0.0
  %948 = vmatpush2.msra.mxu0 0.0
  %949 = vmatprep.subr.mxu0 0.0
  %950 = vmatpush2.msra.mxu0 0.0
  %951 = vmatprep.subr.mxu0 0.0
  %952 = vmatpush2.msra.mxu0 0.0
  %953 = vmatprep.subr.mxu0 0.0
  %954 = vmatpush2.msra.mxu0 0.0
  %955 = vmatprep.subr.mxu0 0.0
  %956 = vmatpush2.msra.mxu0 0.0
  %957 = vmatprep.subr.mxu0 0.0
  %958 = vmatpush2.msra.mxu0 0.0
  %959 = vmatprep.subr.mxu0 0.0
  %960 = vmatpush2.msra.mxu0 0.0
  %961 = vmatprep.subr.mxu0 0.0
  %962 = vmatpush2.msra.mxu0 0.0
  %963 = vmatprep.subr.mxu0 0.0
  %964 = vmatpush2.msra.mxu0 0.0
  %965 = vmatprep.subr.mxu0 0.0
  %966 = vmatpush2.msra.mxu0 0.0
  %967 = vmatprep.subr.mxu0 0.0
  %968 = vmatpush2.msra.mxu0 0.0
  %969 = vmatprep.subr.mxu0 0.0
  %970 = vmatpush2.msra.mxu0 0.0
  %971 = vmatprep.subr.mxu0 0.0
  %972 = vmatpush2.msra.mxu0 0.0
  %973 = vmatprep.subr.mxu0 0.0
  %974 = vmatpush2.msra.mxu0 0.0
  %975 = vmatprep.mubr.f32.mxu0 0.0
  %976 = vmatmul.mubr.f32.gmra.mxu0 %v909
  %v977 = vpop.f32.mrf.mxu0
  %v978 = vadd.f32 %v296, %v977
  %v979 = vpop.f32.mrf.mxu0
  %980 = vdwg.mxu0
  %v981 = vxor.u32 %v978, 2147483648
  %v982 = vmul.f32 %v981, 1.442695
  %v983 = vpow.pop %v982
  %v984 = vadd.f32 %v983, 1.0
  %v985 = vrcp.pop %v984
  %v986 = vmul.f32 1.0, %v985
  %v987 = vtanh.pop %v978
  %v988 = vmul.f32 %v986, %v795
  %990 = vrot.lane.b32.xlu0 %v987, 64
  %v991 = vpop.permute.xlu0 %990
  %v993 = vmul.f32 %v986, %v991
  %995 = vrot.lane.b32.xlu0 %v993, 32
  %v996 = vpop.permute.xlu0 %995
  %v998 = vadd.f32 %v988, %v996
  %v999 = vtanh.pop %v998
  %1001 = vrot.lane.b32.xlu0 %v999, 64
  %v1002 = vpop.permute.xlu0 %1001
  %v1004 = vmul.f32 %v986, %v1002
  %v1005 = vsel %vm188, %v901, 0
  %1007 = vmatprep.subr.mxu0 0.0
  %1008 = vmatpush1.msra.mxu0 0.0
  %1009 = vmatprep.subr.mxu0 0.0
  %1010 = vmatpush1.msra.mxu0 0.0
  %1011 = vmatprep.subr.mxu0 0.0
  %1012 = vmatpush1.msra.mxu0 0.0
  %1013 = vmatprep.subr.mxu0 0.0
  %1014 = vmatpush1.msra.mxu0 0.0
  %1015 = vmatprep.subr.mxu0 0.0
  %1016 = vmatpush1.msra.mxu0 0.0
  %1017 = vmatprep.subr.mxu0 0.0
  %1018 = vmatpush1.msra.mxu0 0.0
  %1019 = vmatprep.subr.mxu0 0.0
  %1020 = vmatpush1.msra.mxu0 0.0
  %1021 = vmatprep.subr.mxu0 0.0
  %1022 = vmatpush1.msra.mxu0 0.0
  %1023 = vmatprep.subr.mxu0 0.0
  %1024 = vmatpush1.msra.mxu0 0.0
  %1025 = vmatprep.subr.mxu0 0.0
  %1026 = vmatpush1.msra.mxu0 0.0
  %1027 = vmatprep.subr.mxu0 0.0
  %1028 = vmatpush1.msra.mxu0 0.0
  %1029 = vmatprep.subr.mxu0 0.0
  %1030 = vmatpush1.msra.mxu0 0.0
  %1031 = vmatprep.subr.mxu0 0.0
  %1032 = vmatpush1.msra.mxu0 %v33
  %1033 = vmatprep.subr.mxu0 0.0
  %1034 = vmatpush1.msra.mxu0 %v32
  %1035 = vmatprep.subr.mxu0 0.0
  %1036 = vmatpush1.msra.mxu0 %v31
  %1037 = vmatprep.subr.mxu0 0.0
  %1038 = vmatpush1.msra.mxu0 %v30
  %1039 = vmatprep.subr.mxu0 0.0
  %1040 = vmatpush2.msra.mxu0 0.0
  %1041 = vmatprep.subr.mxu0 0.0
  %1042 = vmatpush2.msra.mxu0 0.0
  %1043 = vmatprep.subr.mxu0 0.0
  %1044 = vmatpush2.msra.mxu0 0.0
  %1045 = vmatprep.subr.mxu0 0.0
  %1046 = vmatpush2.msra.mxu0 0.0
  %1047 = vmatprep.subr.mxu0 0.0
  %1048 = vmatpush2.msra.mxu0 0.0
  %1049 = vmatprep.subr.mxu0 0.0
  %1050 = vmatpush2.msra.mxu0 0.0
  %1051 = vmatprep.subr.mxu0 0.0
  %1052 = vmatpush2.msra.mxu0 0.0
  %1053 = vmatprep.subr.mxu0 0.0
  %1054 = vmatpush2.msra.mxu0 0.0
  %1055 = vmatprep.subr.mxu0 0.0
  %1056 = vmatpush2.msra.mxu0 0.0
  %1057 = vmatprep.subr.mxu0 0.0
  %1058 = vmatpush2.msra.mxu0 0.0
  %1059 = vmatprep.subr.mxu0 0.0
  %1060 = vmatpush2.msra.mxu0 0.0
  %1061 = vmatprep.subr.mxu0 0.0
  %1062 = vmatpush2.msra.mxu0 0.0
  %1063 = vmatprep.subr.mxu0 0.0
  %1064 = vmatpush2.msra.mxu0 0.0
  %1065 = vmatprep.subr.mxu0 0.0
  %1066 = vmatpush2.msra.mxu0 0.0
  %1067 = vmatprep.subr.mxu0 0.0
  %1068 = vmatpush2.msra.mxu0 0.0
  %1069 = vmatprep.subr.mxu0 0.0
  %1070 = vmatpush2.msra.mxu0 0.0
  %1071 = vmatprep.mubr.f32.mxu0 0.0
  %1072 = vmatmul.mubr.f32.gmra.mxu0 %v1005
  %v1073 = vpop.f32.mrf.mxu0
  %v1074 = vadd.f32 0.0, %v1073
  %v1075 = vpop.f32.mrf.mxu0
  %1076 = vdwg.mxu0
  %v1077 = vadd.f32 %v170, %v1074
  %v1078 = vxor.u32 %v1077, 2147483648
  %v1079 = vmul.f32 %v1078, 1.442695
  %v1080 = vpow.pop %v1079
  %v1081 = vadd.f32 %v1080, 1.0
  %v1082 = vrcp.pop %v1081
  %v1083 = vmul.f32 1.0, %v1082
  %v1084 = vtanh.pop %v1077
  %v1085 = vmul.f32 %v1083, %v892
  %1087 = vrot.lane.b32.xlu0 %v1084, 64
  %v1088 = vpop.permute.xlu0 %1087
  %v1090 = vmul.f32 %v1083, %v1088
  %1092 = vrot.lane.b32.xlu0 %v1090, 32
  %v1093 = vpop.permute.xlu0 %1092
  %v1095 = vadd.f32 %v1085, %v1093
  %v1096 = vtanh.pop %v1095
  %1098 = vrot.lane.b32.xlu0 %v1096, 64
  %v1099 = vpop.permute.xlu0 %1098
  %v1101 = vmul.f32 %v1083, %v1099
  %1103 = vrot.lane.b32.xlu0 %v1101, 32
  %v1104 = vpop.permute.xlu0 %1103
  %1107 = vrot.lane.b32.xlu0 %v1004, 64
  %v1108 = vpop.permute.xlu0 %1107
  %v1110 = vsel %vm188, %v1104, %v1108
  %v1112 = vsel %vm298, %v1110, 0
  %1114 = vmatprep.subr.mxu0 0.0
  %1115 = vmatpush1.msra.mxu0 0.0
  %1116 = vmatprep.subr.mxu0 0.0
  %1117 = vmatpush1.msra.mxu0 0.0
  %1118 = vmatprep.subr.mxu0 0.0
  %1119 = vmatpush1.msra.mxu0 0.0
  %1120 = vmatprep.subr.mxu0 0.0
  %1121 = vmatpush1.msra.mxu0 0.0
  %1122 = vmatprep.subr.mxu0 0.0
  %1123 = vmatpush1.msra.mxu0 0.0
  %1124 = vmatprep.subr.mxu0 0.0
  %1125 = vmatpush1.msra.mxu0 0.0
  %1126 = vmatprep.subr.mxu0 0.0
  %1127 = vmatpush1.msra.mxu0 0.0
  %1128 = vmatprep.subr.mxu0 0.0
  %1129 = vmatpush1.msra.mxu0 0.0
  %1130 = vmatprep.subr.mxu0 0.0
  %1131 = vmatpush1.msra.mxu0 %v42
  %1132 = vmatprep.subr.mxu0 0.0
  %1133 = vmatpush1.msra.mxu0 %v41
  %1134 = vmatprep.subr.mxu0 0.0
  %1135 = vmatpush1.msra.mxu0 %v40
  %1136 = vmatprep.subr.mxu0 0.0
  %1137 = vmatpush1.msra.mxu0 %v39
  %1138 = vmatprep.subr.mxu0 0.0
  %1139 = vmatpush1.msra.mxu0 %v38
  %1140 = vmatprep.subr.mxu0 0.0
  %1141 = vmatpush1.msra.mxu0 %v37
  %1142 = vmatprep.subr.mxu0 0.0
  %1143 = vmatpush1.msra.mxu0 %v36
  %1144 = vmatprep.subr.mxu0 0.0
  %1145 = vmatpush1.msra.mxu0 %v35
  %1146 = vmatprep.subr.mxu0 0.0
  %1147 = vmatpush2.msra.mxu0 0.0
  %1148 = vmatprep.subr.mxu0 0.0
  %1149 = vmatpush2.msra.mxu0 0.0
  %1150 = vmatprep.subr.mxu0 0.0
  %1151 = vmatpush2.msra.mxu0 0.0
  %1152 = vmatprep.subr.mxu0 0.0
  %1153 = vmatpush2.msra.mxu0 0.0
  %1154 = vmatprep.subr.mxu0 0.0
  %1155 = vmatpush2.msra.mxu0 0.0
  %1156 = vmatprep.subr.mxu0 0.0
  %1157 = vmatpush2.msra.mxu0 0.0
  %1158 = vmatprep.subr.mxu0 0.0
  %1159 = vmatpush2.msra.mxu0 0.0
  %1160 = vmatprep.subr.mxu0 0.0
  %1161 = vmatpush2.msra.mxu0 0.0
  %1162 = vmatprep.subr.mxu0 0.0
  %1163 = vmatpush2.msra.mxu0 0.0
  %1164 = vmatprep.subr.mxu0 0.0
  %1165 = vmatpush2.msra.mxu0 0.0
  %1166 = vmatprep.subr.mxu0 0.0
  %1167 = vmatpush2.msra.mxu0 0.0
  %1168 = vmatprep.subr.mxu0 0.0
  %1169 = vmatpush2.msra.mxu0 0.0
  %1170 = vmatprep.subr.mxu0 0.0
  %1171 = vmatpush2.msra.mxu0 0.0
  %1172 = vmatprep.subr.mxu0 0.0
  %1173 = vmatpush2.msra.mxu0 0.0
  %1174 = vmatprep.subr.mxu0 0.0
  %1175 = vmatpush2.msra.mxu0 0.0
  %1176 = vmatprep.subr.mxu0 0.0
  %1177 = vmatpush2.msra.mxu0 0.0
  %1178 = vmatprep.mubr.f32.mxu0 0.0
  %1179 = vmatmul.mubr.f32.gmra.mxu0 %v1112
  %v1180 = vpop.f32.mrf.mxu0
  %v1181 = vadd.f32 %v296, %v1180
  %v1182 = vpop.f32.mrf.mxu0
  %1183 = vdwg.mxu0
  %v1184 = vxor.u32 %v1181, 2147483648
  %v1185 = vmul.f32 %v1184, 1.442695
  %v1186 = vpow.pop %v1185
  %v1187 = vadd.f32 %v1186, 1.0
  %v1188 = vrcp.pop %v1187
  %v1189 = vmul.f32 1.0, %v1188
  %v1190 = vtanh.pop %v1181
  %v1191 = vmul.f32 %v1189, %v998
  %1193 = vrot.lane.b32.xlu0 %v1190, 64
  %v1194 = vpop.permute.xlu0 %1193
  %v1196 = vmul.f32 %v1189, %v1194
  %1198 = vrot.lane.b32.xlu0 %v1196, 32
  %v1199 = vpop.permute.xlu0 %1198
  %v1201 = vadd.f32 %v1191, %v1199
  %v1202 = vtanh.pop %v1201
  %1204 = vrot.lane.b32.xlu0 %v1202, 64
  %v1205 = vpop.permute.xlu0 %1204
  %v1207 = vmul.f32 %v1189, %v1205
  %v1208 = vsel %vm188, %v1104, 0
  %1210 = vmatprep.subr.mxu0 0.0
  %1211 = vmatpush1.msra.mxu0 0.0
  %1212 = vmatprep.subr.mxu0 0.0
  %1213 = vmatpush1.msra.mxu0 0.0
  %1214 = vmatprep.subr.mxu0 0.0
  %1215 = vmatpush1.msra.mxu0 0.0
  %1216 = vmatprep.subr.mxu0 0.0
  %1217 = vmatpush1.msra.mxu0 0.0
  %1218 = vmatprep.subr.mxu0 0.0
  %1219 = vmatpush1.msra.mxu0 0.0
  %1220 = vmatprep.subr.mxu0 0.0
  %1221 = vmatpush1.msra.mxu0 0.0
  %1222 = vmatprep.subr.mxu0 0.0
  %1223 = vmatpush1.msra.mxu0 0.0
  %1224 = vmatprep.subr.mxu0 0.0
  %1225 = vmatpush1.msra.mxu0 0.0
  %1226 = vmatprep.subr.mxu0 0.0
  %1227 = vmatpush1.msra.mxu0 0.0
  %1228 = vmatprep.subr.mxu0 0.0
  %1229 = vmatpush1.msra.mxu0 0.0
  %1230 = vmatprep.subr.mxu0 0.0
  %1231 = vmatpush1.msra.mxu0 0.0
  %1232 = vmatprep.subr.mxu0 0.0
  %1233 = vmatpush1.msra.mxu0 0.0
  %1234 = vmatprep.subr.mxu0 0.0
  %1235 = vmatpush1.msra.mxu0 %v33
  %1236 = vmatprep.subr.mxu0 0.0
  %1237 = vmatpush1.msra.mxu0 %v32
  %1238 = vmatprep.subr.mxu0 0.0
  %1239 = vmatpush1.msra.mxu0 %v31
  %1240 = vmatprep.subr.mxu0 0.0
  %1241 = vmatpush1.msra.mxu0 %v30
  %1242 = vmatprep.subr.mxu0 0.0
  %1243 = vmatpush2.msra.mxu0 0.0
  %1244 = vmatprep.subr.mxu0 0.0
  %1245 = vmatpush2.msra.mxu0 0.0
  %1246 = vmatprep.subr.mxu0 0.0
  %1247 = vmatpush2.msra.mxu0 0.0
  %1248 = vmatprep.subr.mxu0 0.0
  %1249 = vmatpush2.msra.mxu0 0.0
  %1250 = vmatprep.subr.mxu0 0.0
  %1251 = vmatpush2.msra.mxu0 0.0
  %1252 = vmatprep.subr.mxu0 0.0
  %1253 = vmatpush2.msra.mxu0 0.0
  %1254 = vmatprep.subr.mxu0 0.0
  %1255 = vmatpush2.msra.mxu0 0.0
  %1256 = vmatprep.subr.mxu0 0.0
  %1257 = vmatpush2.msra.mxu0 0.0
  %1258 = vmatprep.subr.mxu0 0.0
  %1259 = vmatpush2.msra.mxu0 0.0
  %1260 = vmatprep.subr.mxu0 0.0
  %1261 = vmatpush2.msra.mxu0 0.0
  %1262 = vmatprep.subr.mxu0 0.0
  %1263 = vmatpush2.msra.mxu0 0.0
  %1264 = vmatprep.subr.mxu0 0.0
  %1265 = vmatpush2.msra.mxu0 0.0
  %1266 = vmatprep.subr.mxu0 0.0
  %1267 = vmatpush2.msra.mxu0 0.0
  %1268 = vmatprep.subr.mxu0 0.0
  %1269 = vmatpush2.msra.mxu0 0.0
  %1270 = vmatprep.subr.mxu0 0.0
  %1271 = vmatpush2.msra.mxu0 0.0
  %1272 = vmatprep.subr.mxu0 0.0
  %1273 = vmatpush2.msra.mxu0 0.0
  %1274 = vmatprep.mubr.f32.mxu0 0.0
  %1275 = vmatmul.mubr.f32.gmra.mxu0 %v1208
  %v1276 = vpop.f32.mrf.mxu0
  %v1277 = vadd.f32 0.0, %v1276
  %v1278 = vpop.f32.mrf.mxu0
  %1279 = vdwg.mxu0
  %v1280 = vadd.f32 %v175, %v1277
  %v1281 = vxor.u32 %v1280, 2147483648
  %v1282 = vmul.f32 %v1281, 1.442695
  %v1283 = vpow.pop %v1282
  %v1284 = vadd.f32 %v1283, 1.0
  %v1285 = vrcp.pop %v1284
  %v1286 = vmul.f32 1.0, %v1285
  %v1287 = vtanh.pop %v1280
  %v1288 = vmul.f32 %v1286, %v1095
  %1290 = vrot.lane.b32.xlu0 %v1287, 64
  %v1291 = vpop.permute.xlu0 %1290
  %v1293 = vmul.f32 %v1286, %v1291
  %1295 = vrot.lane.b32.xlu0 %v1293, 32
  %v1296 = vpop.permute.xlu0 %1295
  %v1298 = vadd.f32 %v1288, %v1296
  %v1299 = vtanh.pop %v1298
  %1301 = vrot.lane.b32.xlu0 %v1299, 64
  %v1302 = vpop.permute.xlu0 %1301
  %v1304 = vmul.f32 %v1286, %v1302
  %1306 = vrot.lane.b32.xlu0 %v1304, 32
  %v1307 = vpop.permute.xlu0 %1306
  %1310 = vrot.lane.b32.xlu0 %v1207, 64
  %v1311 = vpop.permute.xlu0 %1310
  %v1313 = vsel %vm188, %v1307, %v1311
  %v1315 = vsel %vm298, %v1313, 0
  %1317 = vmatprep.subr.mxu0 0.0
  %1318 = vmatpush1.msra.mxu0 0.0
  %1319 = vmatprep.subr.mxu0 0.0
  %1320 = vmatpush1.msra.mxu0 0.0
  %1321 = vmatprep.subr.mxu0 0.0
  %1322 = vmatpush1.msra.mxu0 0.0
  %1323 = vmatprep.subr.mxu0 0.0
  %1324 = vmatpush1.msra.mxu0 0.0
  %1325 = vmatprep.subr.mxu0 0.0
  %1326 = vmatpush1.msra.mxu0 0.0
  %1327 = vmatprep.subr.mxu0 0.0
  %1328 = vmatpush1.msra.mxu0 0.0
  %1329 = vmatprep.subr.mxu0 0.0
  %1330 = vmatpush1.msra.mxu0 0.0
  %1331 = vmatprep.subr.mxu0 0.0
  %1332 = vmatpush1.msra.mxu0 0.0
  %1333 = vmatprep.subr.mxu0 0.0
  %1334 = vmatpush1.msra.mxu0 %v42
  %1335 = vmatprep.subr.mxu0 0.0
  %1336 = vmatpush1.msra.mxu0 %v41
  %1337 = vmatprep.subr.mxu0 0.0
  %1338 = vmatpush1.msra.mxu0 %v40
  %1339 = vmatprep.subr.mxu0 0.0
  %1340 = vmatpush1.msra.mxu0 %v39
  %1341 = vmatprep.subr.mxu0 0.0
  %1342 = vmatpush1.msra.mxu0 %v38
  %1343 = vmatprep.subr.mxu0 0.0
  %1344 = vmatpush1.msra.mxu0 %v37
  %1345 = vmatprep.subr.mxu0 0.0
  %1346 = vmatpush1.msra.mxu0 %v36
  %1347 = vmatprep.subr.mxu0 0.0
  %1348 = vmatpush1.msra.mxu0 %v35
  %1349 = vmatprep.subr.mxu0 0.0
  %1350 = vmatpush2.msra.mxu0 0.0
  %1351 = vmatprep.subr.mxu0 0.0
  %1352 = vmatpush2.msra.mxu0 0.0
  %1353 = vmatprep.subr.mxu0 0.0
  %1354 = vmatpush2.msra.mxu0 0.0
  %1355 = vmatprep.subr.mxu0 0.0
  %1356 = vmatpush2.msra.mxu0 0.0
  %1357 = vmatprep.subr.mxu0 0.0
  %1358 = vmatpush2.msra.mxu0 0.0
  %1359 = vmatprep.subr.mxu0 0.0
  %1360 = vmatpush2.msra.mxu0 0.0
  %1361 = vmatprep.subr.mxu0 0.0
  %1362 = vmatpush2.msra.mxu0 0.0
  %1363 = vmatprep.subr.mxu0 0.0
  %1364 = vmatpush2.msra.mxu0 0.0
  %1365 = vmatprep.subr.mxu0 0.0
  %1366 = vmatpush2.msra.mxu0 0.0
  %1367 = vmatprep.subr.mxu0 0.0
  %1368 = vmatpush2.msra.mxu0 0.0
  %1369 = vmatprep.subr.mxu0 0.0
  %1370 = vmatpush2.msra.mxu0 0.0
  %1371 = vmatprep.subr.mxu0 0.0
  %1372 = vmatpush2.msra.mxu0 0.0
  %1373 = vmatprep.subr.mxu0 0.0
  %1374 = vmatpush2.msra.mxu0 0.0
  %1375 = vmatprep.subr.mxu0 0.0
  %1376 = vmatpush2.msra.mxu0 0.0
  %1377 = vmatprep.subr.mxu0 0.0
  %1378 = vmatpush2.msra.mxu0 0.0
  %1379 = vmatprep.subr.mxu0 0.0
  %1380 = vmatpush2.msra.mxu0 0.0
  %1381 = vmatprep.mubr.f32.mxu0 0.0
  %1382 = vmatmul.mubr.f32.gmra.mxu0 %v1315
  %v1383 = vpop.f32.mrf.mxu0
  %v1384 = vadd.f32 %v296, %v1383
  %v1385 = vpop.f32.mrf.mxu0
  %1386 = vdwg.mxu0
  %v1387 = vxor.u32 %v1384, 2147483648
  %v1388 = vmul.f32 %v1387, 1.442695
  %v1389 = vpow.pop %v1388
  %v1390 = vadd.f32 %v1389, 1.0
  %v1391 = vrcp.pop %v1390
  %v1392 = vmul.f32 1.0, %v1391
  %v1393 = vtanh.pop %v1384
  %v1394 = vmul.f32 %v1392, %v1201
  %1396 = vrot.lane.b32.xlu0 %v1393, 64
  %v1397 = vpop.permute.xlu0 %1396
  %v1399 = vmul.f32 %v1392, %v1397
  %1401 = vrot.lane.b32.xlu0 %v1399, 32
  %v1402 = vpop.permute.xlu0 %1401
  %v1404 = vadd.f32 %v1394, %v1402
  %v1405 = vtanh.pop %v1404
  %1407 = vrot.lane.b32.xlu0 %v1405, 64
  %v1408 = vpop.permute.xlu0 %1407
  %v1410 = vmul.f32 %v1392, %v1408
  %v1411 = vsel %vm188, %v1307, 0
  %1413 = vmatprep.subr.mxu0 0.0
  %1414 = vmatpush1.msra.mxu0 0.0
  %1415 = vmatprep.subr.mxu0 0.0
  %1416 = vmatpush1.msra.mxu0 0.0
  %1417 = vmatprep.subr.mxu0 0.0
  %1418 = vmatpush1.msra.mxu0 0.0
  %1419 = vmatprep.subr.mxu0 0.0
  %1420 = vmatpush1.msra.mxu0 0.0
  %1421 = vmatprep.subr.mxu0 0.0
  %1422 = vmatpush1.msra.mxu0 0.0
  %1423 = vmatprep.subr.mxu0 0.0
  %1424 = vmatpush1.msra.mxu0 0.0
  %1425 = vmatprep.subr.mxu0 0.0
  %1426 = vmatpush1.msra.mxu0 0.0
  %1427 = vmatprep.subr.mxu0 0.0
  %1428 = vmatpush1.msra.mxu0 0.0
  %1429 = vmatprep.subr.mxu0 0.0
  %1430 = vmatpush1.msra.mxu0 0.0
  %1431 = vmatprep.subr.mxu0 0.0
  %1432 = vmatpush1.msra.mxu0 0.0
  %1433 = vmatprep.subr.mxu0 0.0
  %1434 = vmatpush1.msra.mxu0 0.0
  %1435 = vmatprep.subr.mxu0 0.0
  %1436 = vmatpush1.msra.mxu0 0.0
  %1437 = vmatprep.subr.mxu0 0.0
  %1438 = vmatpush1.msra.mxu0 %v33
  %1439 = vmatprep.subr.mxu0 0.0
  %1440 = vmatpush1.msra.mxu0 %v32
  %1441 = vmatprep.subr.mxu0 0.0
  %1442 = vmatpush1.msra.mxu0 %v31
  %1443 = vmatprep.subr.mxu0 0.0
  %1444 = vmatpush1.msra.mxu0 %v30
  %1445 = vmatprep.subr.mxu0 0.0
  %1446 = vmatpush2.msra.mxu0 0.0
  %1447 = vmatprep.subr.mxu0 0.0
  %1448 = vmatpush2.msra.mxu0 0.0
  %1449 = vmatprep.subr.mxu0 0.0
  %1450 = vmatpush2.msra.mxu0 0.0
  %1451 = vmatprep.subr.mxu0 0.0
  %1452 = vmatpush2.msra.mxu0 0.0
  %1453 = vmatprep.subr.mxu0 0.0
  %1454 = vmatpush2.msra.mxu0 0.0
  %1455 = vmatprep.subr.mxu0 0.0
  %1456 = vmatpush2.msra.mxu0 0.0
  %1457 = vmatprep.subr.mxu0 0.0
  %1458 = vmatpush2.msra.mxu0 0.0
  %1459 = vmatprep.subr.mxu0 0.0
  %1460 = vmatpush2.msra.mxu0 0.0
  %1461 = vmatprep.subr.mxu0 0.0
  %1462 = vmatpush2.msra.mxu0 0.0
  %1463 = vmatprep.subr.mxu0 0.0
  %1464 = vmatpush2.msra.mxu0 0.0
  %1465 = vmatprep.subr.mxu0 0.0
  %1466 = vmatpush2.msra.mxu0 0.0
  %1467 = vmatprep.subr.mxu0 0.0
  %1468 = vmatpush2.msra.mxu0 0.0
  %1469 = vmatprep.subr.mxu0 0.0
  %1470 = vmatpush2.msra.mxu0 0.0
  %1471 = vmatprep.subr.mxu0 0.0
  %1472 = vmatpush2.msra.mxu0 0.0
  %1473 = vmatprep.subr.mxu0 0.0
  %1474 = vmatpush2.msra.mxu0 0.0
  %1475 = vmatprep.subr.mxu0 0.0
  %1476 = vmatpush2.msra.mxu0 0.0
  %1477 = vmatprep.mubr.f32.mxu0 0.0
  %1478 = vmatmul.mubr.f32.gmra.mxu0 %v1411
  %v1479 = vpop.f32.mrf.mxu0
  %v1480 = vadd.f32 0.0, %v1479
  %v1481 = vpop.f32.mrf.mxu0
  %1482 = vdwg.mxu0
  %v1483 = vadd.f32 %v180, %v1480
  %v1484 = vxor.u32 %v1483, 2147483648
  %v1485 = vmul.f32 %v1484, 1.442695
  %v1486 = vpow.pop %v1485
  %v1487 = vadd.f32 %v1486, 1.0
  %v1488 = vrcp.pop %v1487
  %v1489 = vmul.f32 1.0, %v1488
  %v1490 = vtanh.pop %v1483
  %v1491 = vmul.f32 %v1489, %v1298
  %1493 = vrot.lane.b32.xlu0 %v1490, 64
  %v1494 = vpop.permute.xlu0 %1493
  %v1496 = vmul.f32 %v1489, %v1494
  %1498 = vrot.lane.b32.xlu0 %v1496, 32
  %v1499 = vpop.permute.xlu0 %1498
  %v1501 = vadd.f32 %v1491, %v1499
  %v1502 = vtanh.pop %v1501
  %1504 = vrot.lane.b32.xlu0 %v1502, 64
  %v1505 = vpop.permute.xlu0 %1504
  %v1507 = vmul.f32 %v1489, %v1505
  %1509 = vrot.lane.b32.xlu0 %v1507, 32
  %v1510 = vpop.permute.xlu0 %1509
  %1513 = vrot.lane.b32.xlu0 %v1410, 64
  %v1514 = vpop.permute.xlu0 %1513
  %v1516 = vsel %vm188, %v1510, %v1514
  %v1518 = vsel %vm298, %v1516, 0
  %1520 = vmatprep.subr.mxu0 0.0
  %1521 = vmatpush1.msra.mxu0 0.0
  %1522 = vmatprep.subr.mxu0 0.0
  %1523 = vmatpush1.msra.mxu0 0.0
  %1524 = vmatprep.subr.mxu0 0.0
  %1525 = vmatpush1.msra.mxu0 0.0
  %1526 = vmatprep.subr.mxu0 0.0
  %1527 = vmatpush1.msra.mxu0 0.0
  %1528 = vmatprep.subr.mxu0 0.0
  %1529 = vmatpush1.msra.mxu0 0.0
  %1530 = vmatprep.subr.mxu0 0.0
  %1531 = vmatpush1.msra.mxu0 0.0
  %1532 = vmatprep.subr.mxu0 0.0
  %1533 = vmatpush1.msra.mxu0 0.0
  %1534 = vmatprep.subr.mxu0 0.0
  %1535 = vmatpush1.msra.mxu0 0.0
  %1536 = vmatprep.subr.mxu0 0.0
  %1537 = vmatpush1.msra.mxu0 %v42
  %1538 = vmatprep.subr.mxu0 0.0
  %1539 = vmatpush1.msra.mxu0 %v41
  %1540 = vmatprep.subr.mxu0 0.0
  %1541 = vmatpush1.msra.mxu0 %v40
  %1542 = vmatprep.subr.mxu0 0.0
  %1543 = vmatpush1.msra.mxu0 %v39
  %1544 = vmatprep.subr.mxu0 0.0
  %1545 = vmatpush1.msra.mxu0 %v38
  %1546 = vmatprep.subr.mxu0 0.0
  %1547 = vmatpush1.msra.mxu0 %v37
  %1548 = vmatprep.subr.mxu0 0.0
  %1549 = vmatpush1.msra.mxu0 %v36
  %1550 = vmatprep.subr.mxu0 0.0
  %1551 = vmatpush1.msra.mxu0 %v35
  %1552 = vmatprep.subr.mxu0 0.0
  %1553 = vmatpush2.msra.mxu0 0.0
  %1554 = vmatprep.subr.mxu0 0.0
  %1555 = vmatpush2.msra.mxu0 0.0
  %1556 = vmatprep.subr.mxu0 0.0
  %1557 = vmatpush2.msra.mxu0 0.0
  %1558 = vmatprep.subr.mxu0 0.0
  %1559 = vmatpush2.msra.mxu0 0.0
  %1560 = vmatprep.subr.mxu0 0.0
  %1561 = vmatpush2.msra.mxu0 0.0
  %1562 = vmatprep.subr.mxu0 0.0
  %1563 = vmatpush2.msra.mxu0 0.0
  %1564 = vmatprep.subr.mxu0 0.0
  %1565 = vmatpush2.msra.mxu0 0.0
  %1566 = vmatprep.subr.mxu0 0.0
  %1567 = vmatpush2.msra.mxu0 0.0
  %1568 = vmatprep.subr.mxu0 0.0
  %1569 = vmatpush2.msra.mxu0 0.0
  %1570 = vmatprep.subr.mxu0 0.0
  %1571 = vmatpush2.msra.mxu0 0.0
  %1572 = vmatprep.subr.mxu0 0.0
  %1573 = vmatpush2.msra.mxu0 0.0
  %1574 = vmatprep.subr.mxu0 0.0
  %1575 = vmatpush2.msra.mxu0 0.0
  %1576 = vmatprep.subr.mxu0 0.0
  %1577 = vmatpush2.msra.mxu0 0.0
  %1578 = vmatprep.subr.mxu0 0.0
  %1579 = vmatpush2.msra.mxu0 0.0
  %1580 = vmatprep.subr.mxu0 0.0
  %1581 = vmatpush2.msra.mxu0 0.0
  %1582 = vmatprep.subr.mxu0 0.0
  %1583 = vmatpush2.msra.mxu0 0.0
  %1584 = vmatprep.mubr.f32.mxu0 0.0
  %1585 = vmatmul.mubr.f32.gmra.mxu0 %v1518
  %v1586 = vpop.f32.mrf.mxu0
  %v1587 = vadd.f32 %v296, %v1586
  %v1588 = vpop.f32.mrf.mxu0
  %1589 = vdwg.mxu0
  %v1590 = vxor.u32 %v1587, 2147483648
  %v1591 = vmul.f32 %v1590, 1.442695
  %v1592 = vpow.pop %v1591
  %v1593 = vadd.f32 %v1592, 1.0
  %v1594 = vrcp.pop %v1593
  %v1595 = vmul.f32 1.0, %v1594
  %v1596 = vtanh.pop %v1587
  %v1597 = vmul.f32 %v1595, %v1404
  %1599 = vrot.lane.b32.xlu0 %v1596, 64
  %v1600 = vpop.permute.xlu0 %1599
  %v1602 = vmul.f32 %v1595, %v1600
  %1604 = vrot.lane.b32.xlu0 %v1602, 32
  %v1605 = vpop.permute.xlu0 %1604
  %v1607 = vadd.f32 %v1597, %v1605
  %v1608 = vtanh.pop %v1607
  %1610 = vrot.lane.b32.xlu0 %v1608, 64
  %v1611 = vpop.permute.xlu0 %1610
  %v1613 = vmul.f32 %v1595, %v1611
  %v1614 = vsel %vm188, %v1510, 0
  %1616 = vmatprep.subr.mxu0 0.0
  %1617 = vmatpush1.msra.mxu0 0.0
  %1618 = vmatprep.subr.mxu0 0.0
  %1619 = vmatpush1.msra.mxu0 0.0
  %1620 = vmatprep.subr.mxu0 0.0
  %1621 = vmatpush1.msra.mxu0 0.0
  %1622 = vmatprep.subr.mxu0 0.0
  %1623 = vmatpush1.msra.mxu0 0.0
  %1624 = vmatprep.subr.mxu0 0.0
  %1625 = vmatpush1.msra.mxu0 0.0
  %1626 = vmatprep.subr.mxu0 0.0
  %1627 = vmatpush1.msra.mxu0 0.0
  %1628 = vmatprep.subr.mxu0 0.0
  %1629 = vmatpush1.msra.mxu0 0.0
  %1630 = vmatprep.subr.mxu0 0.0
  %1631 = vmatpush1.msra.mxu0 0.0
  %1632 = vmatprep.subr.mxu0 0.0
  %1633 = vmatpush1.msra.mxu0 0.0
  %1634 = vmatprep.subr.mxu0 0.0
  %1635 = vmatpush1.msra.mxu0 0.0
  %1636 = vmatprep.subr.mxu0 0.0
  %1637 = vmatpush1.msra.mxu0 0.0
  %1638 = vmatprep.subr.mxu0 0.0
  %1639 = vmatpush1.msra.mxu0 0.0
  %1640 = vmatprep.subr.mxu0 0.0
  %1641 = vmatpush1.msra.mxu0 %v33
  %1642 = vmatprep.subr.mxu0 0.0
  %1643 = vmatpush1.msra.mxu0 %v32
  %1644 = vmatprep.subr.mxu0 0.0
  %1645 = vmatpush1.msra.mxu0 %v31
  %1646 = vmatprep.subr.mxu0 0.0
  %1647 = vmatpush1.msra.mxu0 %v30
  %1648 = vmatprep.subr.mxu0 0.0
  %1649 = vmatpush2.msra.mxu0 0.0
  %1650 = vmatprep.subr.mxu0 0.0
  %1651 = vmatpush2.msra.mxu0 0.0
  %1652 = vmatprep.subr.mxu0 0.0
  %1653 = vmatpush2.msra.mxu0 0.0
  %1654 = vmatprep.subr.mxu0 0.0
  %1655 = vmatpush2.msra.mxu0 0.0
  %1656 = vmatprep.subr.mxu0 0.0
  %1657 = vmatpush2.msra.mxu0 0.0
  %1658 = vmatprep.subr.mxu0 0.0
  %1659 = vmatpush2.msra.mxu0 0.0
  %1660 = vmatprep.subr.mxu0 0.0
  %1661 = vmatpush2.msra.mxu0 0.0
  %1662 = vmatprep.subr.mxu0 0.0
  %1663 = vmatpush2.msra.mxu0 0.0
  %1664 = vmatprep.subr.mxu0 0.0
  %1665 = vmatpush2.msra.mxu0 0.0
  %1666 = vmatprep.subr.mxu0 0.0
  %1667 = vmatpush2.msra.mxu0 0.0
  %1668 = vmatprep.subr.mxu0 0.0
  %1669 = vmatpush2.msra.mxu0 0.0
  %1670 = vmatprep.subr.mxu0 0.0
  %1671 = vmatpush2.msra.mxu0 0.0
  %1672 = vmatprep.subr.mxu0 0.0
  %1673 = vmatpush2.msra.mxu0 0.0
  %1674 = vmatprep.subr.mxu0 0.0
  %1675 = vmatpush2.msra.mxu0 0.0
  %1676 = vmatprep.subr.mxu0 0.0
  %1677 = vmatpush2.msra.mxu0 0.0
  %1678 = vmatprep.subr.mxu0 0.0
  %1679 = vmatpush2.msra.mxu0 0.0
  %1680 = vmatprep.mubr.f32.mxu0 0.0
  %1681 = vmatmul.mubr.f32.gmra.mxu0 %v1614
  %v1682 = vpop.f32.mrf.mxu0
  %v1683 = vadd.f32 0.0, %v1682
  %v1684 = vpop.f32.mrf.mxu0
  %1685 = vdwg.mxu0
  %v1686 = vadd.f32 %v185, %v1683
  %v1687 = vxor.u32 %v1686, 2147483648
  %v1688 = vmul.f32 %v1687, 1.442695
  %v1689 = vpow.pop %v1688
  %v1690 = vadd.f32 %v1689, 1.0
  %v1691 = vrcp.pop %v1690
  %v1692 = vmul.f32 1.0, %v1691
  %v1693 = vtanh.pop %v1686
  %v1694 = vmul.f32 %v1692, %v1501
  %1696 = vrot.lane.b32.xlu0 %v1693, 64
  %v1697 = vpop.permute.xlu0 %1696
  %v1699 = vmul.f32 %v1692, %v1697
  %1701 = vrot.lane.b32.xlu0 %v1699, 32
  %v1702 = vpop.permute.xlu0 %1701
  %v1704 = vadd.f32 %v1694, %v1702
  %v1705 = vtanh.pop %v1704
  %1707 = vrot.lane.b32.xlu0 %v1705, 64
  %v1708 = vpop.permute.xlu0 %1707
  %v1710 = vmul.f32 %v1692, %v1708
  %1712 = vrot.lane.b32.xlu0 %v1710, 32
  %v1713 = vpop.permute.xlu0 %1712
  %1716 = vrot.lane.b32.xlu0 %v1613, 64
  %v1717 = vpop.permute.xlu0 %1716
  %v1719 = vsel %vm188, %v1713, %v1717
  %v1721 = vsel %vm298, %v1719, 0
  %1723 = vmatprep.subr.mxu0 0.0
  %1724 = vmatpush1.msra.mxu0 0.0
  %1725 = vmatprep.subr.mxu0 0.0
  %1726 = vmatpush1.msra.mxu0 0.0
  %1727 = vmatprep.subr.mxu0 0.0
  %1728 = vmatpush1.msra.mxu0 0.0
  %1729 = vmatprep.subr.mxu0 0.0
  %1730 = vmatpush1.msra.mxu0 0.0
  %1731 = vmatprep.subr.mxu0 0.0
  %1732 = vmatpush1.msra.mxu0 0.0
  %1733 = vmatprep.subr.mxu0 0.0
  %1734 = vmatpush1.msra.mxu0 0.0
  %1735 = vmatprep.subr.mxu0 0.0
  %1736 = vmatpush1.msra.mxu0 0.0
  %1737 = vmatprep.subr.mxu0 0.0
  %1738 = vmatpush1.msra.mxu0 0.0
  %1739 = vmatprep.subr.mxu0 0.0
  %1740 = vmatpush1.msra.mxu0 %v42
  %1741 = vmatprep.subr.mxu0 0.0
  %1742 = vmatpush1.msra.mxu0 %v41
  %1743 = vmatprep.subr.mxu0 0.0
  %1744 = vmatpush1.msra.mxu0 %v40
  %1745 = vmatprep.subr.mxu0 0.0
  %1746 = vmatpush1.msra.mxu0 %v39
  %1747 = vmatprep.subr.mxu0 0.0
  %1748 = vmatpush1.msra.mxu0 %v38
  %1749 = vmatprep.subr.mxu0 0.0
  %1750 = vmatpush1.msra.mxu0 %v37
  %1751 = vmatprep.subr.mxu0 0.0
  %1752 = vmatpush1.msra.mxu0 %v36
  %1753 = vmatprep.subr.mxu0 0.0
  %1754 = vmatpush1.msra.mxu0 %v35
  %1755 = vmatprep.subr.mxu0 0.0
  %1756 = vmatpush2.msra.mxu0 0.0
  %1757 = vmatprep.subr.mxu0 0.0
  %1758 = vmatpush2.msra.mxu0 0.0
  %1759 = vmatprep.subr.mxu0 0.0
  %1760 = vmatpush2.msra.mxu0 0.0
  %1761 = vmatprep.subr.mxu0 0.0
  %1762 = vmatpush2.msra.mxu0 0.0
  %1763 = vmatprep.subr.mxu0 0.0
  %1764 = vmatpush2.msra.mxu0 0.0
  %1765 = vmatprep.subr.mxu0 0.0
  %1766 = vmatpush2.msra.mxu0 0.0
  %1767 = vmatprep.subr.mxu0 0.0
  %1768 = vmatpush2.msra.mxu0 0.0
  %1769 = vmatprep.subr.mxu0 0.0
  %1770 = vmatpush2.msra.mxu0 0.0
  %1771 = vmatprep.subr.mxu0 0.0
  %1772 = vmatpush2.msra.mxu0 0.0
  %1773 = vmatprep.subr.mxu0 0.0
  %1774 = vmatpush2.msra.mxu0 0.0
  %1775 = vmatprep.subr.mxu0 0.0
  %1776 = vmatpush2.msra.mxu0 0.0
  %1777 = vmatprep.subr.mxu0 0.0
  %1778 = vmatpush2.msra.mxu0 0.0
  %1779 = vmatprep.subr.mxu0 0.0
  %1780 = vmatpush2.msra.mxu0 0.0
  %1781 = vmatprep.subr.mxu0 0.0
  %1782 = vmatpush2.msra.mxu0 0.0
  %1783 = vmatprep.subr.mxu0 0.0
  %1784 = vmatpush2.msra.mxu0 0.0
  %1785 = vmatprep.subr.mxu0 0.0
  %1786 = vmatpush2.msra.mxu0 0.0
  %1787 = vmatprep.mubr.f32.mxu0 0.0
  %1788 = vmatmul.mubr.f32.gmra.mxu0 %v1721
  %v1789 = vpop.f32.mrf.mxu0
  %v1790 = vadd.f32 %v296, %v1789
  %v1791 = vpop.f32.mrf.mxu0
  %1792 = vdwg.mxu0
  %v1793 = vxor.u32 %v1790, 2147483648
  %v1794 = vmul.f32 %v1793, 1.442695
  %v1795 = vpow.pop %v1794
  %v1796 = vadd.f32 %v1795, 1.0
  %v1797 = vrcp.pop %v1796
  %v1798 = vmul.f32 1.0, %v1797
  %v1799 = vtanh.pop %v1790
  %v1800 = vmul.f32 %v1798, %v1607
  %1802 = vrot.lane.b32.xlu0 %v1799, 64
  %v1803 = vpop.permute.xlu0 %1802
  %v1805 = vmul.f32 %v1798, %v1803
  %1807 = vrot.lane.b32.xlu0 %v1805, 32
  %v1808 = vpop.permute.xlu0 %1807
  %v1810 = vadd.f32 %v1800, %v1808
  %v1811 = vtanh.pop %v1810
  %1813 = vrot.lane.b32.xlu0 %v1811, 64
  %v1814 = vpop.permute.xlu0 %1813
  %v1816 = vmul.f32 %v1798, %v1814
  %v1817 = vld [vmem:[%s6] sm:$0xff]
  %v1818 = vld [vmem:[%s6 + $0x8] sm:$0xff]
  %v1819 = vld [vmem:[%s6 + $0x10] sm:$0xff]
  %v1820 = vld [vmem:[%s6 + $0x18] sm:$0xff]
  %v1821 = vld [vmem:[%s7] sm:$0x1]
  %v1823 = vlaneseq
  %v1824 = vshrl.u32 %v1823, 7
  %v1825 = vsub.s32 0, %v1824
  %v1826 = vrot.slane %v1821, %v1825
  %1829 = vrot.lane.b32.xlu0 %v1816, 32
  %v1830 = vpop.permute.xlu0 %1829
  %v1831 = vsel %vm188, %v1830, 0
  %1833 = vmatprep.subr.mxu0 0.0
  %1834 = vmatpush1.msra.mxu0 0.0
  %1835 = vmatprep.subr.mxu0 0.0
  %1836 = vmatpush1.msra.mxu0 0.0
  %1837 = vmatprep.subr.mxu0 0.0
  %1838 = vmatpush1.msra.mxu0 0.0
  %1839 = vmatprep.subr.mxu0 0.0
  %1840 = vmatpush1.msra.mxu0 0.0
  %1841 = vmatprep.subr.mxu0 0.0
  %1842 = vmatpush1.msra.mxu0 0.0
  %1843 = vmatprep.subr.mxu0 0.0
  %1844 = vmatpush1.msra.mxu0 0.0
  %1845 = vmatprep.subr.mxu0 0.0
  %1846 = vmatpush1.msra.mxu0 0.0
  %1847 = vmatprep.subr.mxu0 0.0
  %1848 = vmatpush1.msra.mxu0 0.0
  %1849 = vmatprep.subr.mxu0 0.0
  %1850 = vmatpush1.msra.mxu0 0.0
  %1851 = vmatprep.subr.mxu0 0.0
  %1852 = vmatpush1.msra.mxu0 0.0
  %1853 = vmatprep.subr.mxu0 0.0
  %1854 = vmatpush1.msra.mxu0 0.0
  %1855 = vmatprep.subr.mxu0 0.0
  %1856 = vmatpush1.msra.mxu0 0.0
  %1857 = vmatprep.subr.mxu0 0.0
  %1858 = vmatpush1.msra.mxu0 %v1820
  %1859 = vmatprep.subr.mxu0 0.0
  %1860 = vmatpush1.msra.mxu0 %v1819
  %1861 = vmatprep.subr.mxu0 0.0
  %1862 = vmatpush1.msra.mxu0 %v1818
  %1863 = vmatprep.subr.mxu0 0.0
  %1864 = vmatpush1.msra.mxu0 %v1817
  %1865 = vmatprep.subr.mxu0 0.0
  %1866 = vmatpush2.msra.mxu0 0.0
  %1867 = vmatprep.subr.mxu0 0.0
  %1868 = vmatpush2.msra.mxu0 0.0
  %1869 = vmatprep.subr.mxu0 0.0
  %1870 = vmatpush2.msra.mxu0 0.0
  %1871 = vmatprep.subr.mxu0 0.0
  %1872 = vmatpush2.msra.mxu0 0.0
  %1873 = vmatprep.subr.mxu0 0.0
  %1874 = vmatpush2.msra.mxu0 0.0
  %1875 = vmatprep.subr.mxu0 0.0
  %1876 = vmatpush2.msra.mxu0 0.0
  %1877 = vmatprep.subr.mxu0 0.0
  %1878 = vmatpush2.msra.mxu0 0.0
  %1879 = vmatprep.subr.mxu0 0.0
  %1880 = vmatpush2.msra.mxu0 0.0
  %1881 = vmatprep.subr.mxu0 0.0
  %1882 = vmatpush2.msra.mxu0 0.0
  %1883 = vmatprep.subr.mxu0 0.0
  %1884 = vmatpush2.msra.mxu0 0.0
  %1885 = vmatprep.subr.mxu0 0.0
  %1886 = vmatpush2.msra.mxu0 0.0
  %1887 = vmatprep.subr.mxu0 0.0
  %1888 = vmatpush2.msra.mxu0 0.0
  %1889 = vmatprep.subr.mxu0 0.0
  %1890 = vmatpush2.msra.mxu0 0.0
  %1891 = vmatprep.subr.mxu0 0.0
  %1892 = vmatpush2.msra.mxu0 0.0
  %1893 = vmatprep.subr.mxu0 0.0
  %1894 = vmatpush2.msra.mxu0 0.0
  %1895 = vmatprep.subr.mxu0 0.0
  %1896 = vmatpush2.msra.mxu0 0.0
  %1897 = vmatprep.mubr.f32.mxu0 0.0
  %1898 = vmatmul.mubr.f32.gmra.mxu0 %v1831
  %v1899 = vpop.f32.mrf.mxu0
  %v1900 = vadd.f32 %v1826, %v1899
  %v1901 = vpop.f32.mrf.mxu0
  %1902 = vdwg.mxu0
  %vm1903 = vcmask 48128
  %1904 = vst.msk [vmem:[%s8] sm:$0xff] %vm1903, %v1900
  // Predicated region
  $region34: #{semg_lstm_forward.1} parent=0 // pred_check
    _
  $region35: #{semg_lstm_forward.1} parent=0 // pred_check_branch
    %1906 = sbr.rel (0) target = $region37
  $region36: #{semg_lstm_forward.1} parent=0 // pred_region
    _
  $region37: #{semg_lstm_forward.1} parent=0 // pred_fallthru
    _
  // Predicated region
  $region38: #{semg_lstm_forward.1} parent=0 // pred_check
    _
  $region39: #{semg_lstm_forward.1} parent=0 // pred_check_branch
    %1908 = sbr.rel (0) target = $region41
  $region40: #{semg_lstm_forward.1} parent=0 // pred_region
    _
  $region41: #{semg_lstm_forward.1} parent=0 // pred_fallthru
    _

</llo_original>
